<compile_context>
chip_gen: v6e
topology: v6e:2x2x1
jax: 0.10.0
libtpu: 0.0.40
codegen_flags: <defaults>
</compile_context>

<pallas_src>
import math
from functools import partial

import jax
import jax.numpy as jnp
from jax import lax
from jax.experimental import pallas as pl
from jax.experimental.pallas import tpu as pltpu


def conv_attn_proj_kernel(views_ref, taps_ref, sel_ref, wproj_ref, bias_ref,
                          out_ref, *, B, N, s):
    """Fused Conv_Attention forward, all batches in one grid step.

    views_ref : (9, B*N, C)     VMEM  9 zero-padded 3x3-neighbour shifts of the
                                      input image, lane-dense (C = s*s lanes).
    taps_ref  : (3, 10, B*N, 1) VMEM  per-row depthwise taps (t<9) + bias (t=9)
                                      for q/k/v; q taps pre-scaled by attn scale.
    sel_ref   : (s, B*N, B*N*s) VMEM  one-hot row-selection matrices encoding
                                      the transpose(1,2).reshape(B,N,C) shuffle.
    wproj_ref : (s, s, C)       VMEM  wproj[u] = wp[:, u*s:(u+1)*s].T
    bias_ref  : (1, C)          VMEM  projection bias.
    out_ref   : (B*N, C)        VMEM  output rows (b*N + m).
    """
    BN = B * N
    C = s * s
    R = BN * s

    # ---- depthwise 3x3 conv (lane-dense): 27 full-width multiply-adds ------
    v0 = views_ref[0]
    q = v0 * taps_ref[0, 0]
    k = v0 * taps_ref[1, 0]
    v = v0 * taps_ref[2, 0]
    for t in range(1, 9):
        vt = views_ref[t]
        q = q + vt * taps_ref[0, t]
        k = k + vt * taps_ref[1, t]
        v = v + vt * taps_ref[2, t]
    q = q + taps_ref[0, 9]          # conv biases (q bias already * scale)
    k = k + taps_ref[1, 9]
    v = v + taps_ref[2, 9]

    # ---- per-(b,n) 8x8 attention as one masked block-diagonal matmul -------
    # Rows of q64/k64/v64: r = i*BN + (b*N + n)  (image-row-i major), built
    # with aligned lane slices + sublane concat (no minor-dim reshape).
    q64 = jnp.concatenate([q[:, i * s:(i + 1) * s] for i in range(s)], axis=0)
    k64 = jnp.concatenate([k[:, i * s:(i + 1) * s] for i in range(s)], axis=0)
    v64 = jnp.concatenate([v[:, i * s:(i + 1) * s] for i in range(s)], axis=0)

    scores = lax.dot_general(q64.astype(jnp.bfloat16), k64.astype(jnp.bfloat16),
                             (((1,), (1,)), ((), ())),
                             preferred_element_type=jnp.float32)      # (R, R)
    rid = lax.broadcasted_iota(jnp.int32, (R, R), 0)
    cid = lax.broadcasted_iota(jnp.int32, (R, R), 1)
    scores = jnp.where((rid % BN) == (cid % BN), scores, -1e30)
    scores = scores - jnp.max(scores, axis=-1, keepdims=True)
    p = jnp.exp(scores)
    attn = p / jnp.sum(p, axis=-1, keepdims=True)                     # exact
    y64 = jnp.dot(attn.astype(jnp.bfloat16), v64.astype(jnp.bfloat16),
                  preferred_element_type=jnp.float32)                 # (R, s)

    # ---- transpose(1,2).reshape(B,N,C) + nn.Linear, value-carried ----------
    # out[R=b*N+m, :] = sum_u (sel[u] @ y64) @ wp[:, u*s:(u+1)*s].T + bp
    acc = jnp.zeros((BN, C), jnp.float32)
    for u in range(s):
        rows = jnp.dot(sel_ref[u], y64, preferred_element_type=jnp.float32)      # (BN, s)
        acc = acc + jnp.dot(rows, wproj_ref[u], preferred_element_type=jnp.float32)
    out_ref[...] = (acc + bias_ref[...]).astype(out_ref.dtype)


def conv_attention_forward(x, params, num_heads):
    wq, bq = params['wq'], params['bq']
    wk, bk = params['wk'], params['bk']
    wv, bv = params['wv'], params['bv']
    wp, bp = params['wp'], params['bp']

    B, N, C = x.shape
    s = int(round(math.sqrt(C)))
    assert s * s == C, "C must be a perfect square (matches torch reshape)"
    BN = B * N
    scale = float((C // num_heads) ** -0.5)

    # 9 shifted 3x3-neighbour views of the image, lane-dense (9, BN, C).
    xi = x.reshape(BN, s, s)
    xp = jnp.pad(xi, ((0, 0), (1, 1), (1, 1)))
    views = jnp.stack([xp[:, dy:dy + s, dx:dx + s].reshape(BN, C)
                       for dy in range(3) for dx in range(3)],
                      axis=0).astype(jnp.float32)

    # Per-row conv taps + bias as broadcastable (BN, 1) VMEM columns.
    # The attention scale is folded into the q taps:  (q.k)*scale == (scale*q).k
    def row_taps(w, b, mult):
        t = jnp.concatenate([w.reshape(N, 9), b.reshape(N, 1)], axis=1) * mult   # (N, 10)
        t = jnp.tile(t, (B, 1))                                                  # (BN, 10)
        return jnp.transpose(t)[:, :, None]                                      # (10, BN, 1)
    taps = jnp.stack([row_taps(wq, bq, scale),
                      row_taps(wk, bk, 1.0),
                      row_taps(wv, bv, 1.0)], axis=0).astype(jnp.float32)        # (3,10,BN,1)

    # Host-precomputed epilogue constants.
    # In-kernel y64 row order is r = i*BN + b*N + n.  Output row R = b*N + m,
    # lane block u (columns u*s..u*s+s) comes from y[b, n, i, :] with
    # i*N + n == m*s + u, multiplied by wp[:, u*s:(u+1)*s].
    Rr = jnp.arange(BN)
    m_of = Rr % N
    b_of = Rr // N
    sel = []
    for u in range(s):
        t = m_of * s + u
        src = (t // N) * BN + b_of * N + (t % N)                     # (BN,)
        sel.append(jax.nn.one_hot(src, BN * s, dtype=jnp.float32))   # (BN, BN*s)
    sel = jnp.stack(sel, axis=0)                                     # (s, BN, BN*s)
    wproj = jnp.transpose(wp).reshape(s, s, C).astype(jnp.float32)   # wproj[u,j,o] = wp[o,u*s+j]

    kernel = partial(conv_attn_proj_kernel, B=B, N=N, s=s)
    zeros2 = lambda i: (0, 0)
    zeros3 = lambda i: (0, 0, 0)
    zeros4 = lambda i: (0, 0, 0, 0)

    out = pl.pallas_call(
        kernel,
        out_shape=jax.ShapeDtypeStruct((BN, C), jnp.float32),
        grid=(1,),
        in_specs=[
            pl.BlockSpec((9, BN, C), zeros3),
            pl.BlockSpec((3, 10, BN, 1), zeros4),
            pl.BlockSpec((s, BN, BN * s), zeros3),
            pl.BlockSpec((s, s, C), zeros3),
            pl.BlockSpec((1, C), zeros2),
        ],
        out_specs=pl.BlockSpec((BN, C), zeros2),
        compiler_params=pltpu.CompilerParams(
            dimension_semantics=("arbitrary",)),
    )(views, taps, sel, wproj, bp.reshape(1, C).astype(jnp.float32))

    return out.reshape(B, N, C)


def reference_forward(x, params, num_heads):
    """Pure-JAX reference with the exact PyTorch semantics."""
    wq, bq = params['wq'], params['bq']
    wk, bk = params['wk'], params['bk']
    wv, bv = params['wv'], params['bv']
    wp, bp = params['wp'], params['bp']

    B, N, C = x.shape
    s = int(round(math.sqrt(C)))
    scale = float((C // num_heads) ** -0.5)
    xi = x.reshape(B, N, s, s)

    def dw(w, b):
        out = lax.conv_general_dilated(
            xi, w[:, None, :, :], window_strides=(1, 1),
            padding=((1, 1), (1, 1)),
            dimension_numbers=('NCHW', 'OIHW', 'NCHW'),
            feature_group_count=N,
            precision=lax.Precision.HIGHEST)
        return out + b[None, :, None, None]

    q, k, v = dw(wq, bq), dw(wk, bk), dw(wv, bv)
    attn = jnp.einsum('bnij,bnkj->bnik', q, k,
                      precision=lax.Precision.HIGHEST) * scale
    attn = jax.nn.softmax(attn, axis=-1)
    y = jnp.einsum('bnik,bnkj->bnij', attn, v,
                   precision=lax.Precision.HIGHEST)
    y = jnp.transpose(y, (0, 2, 1, 3)).reshape(B, N, C)
    return jnp.dot(y, wp.T, precision=lax.Precision.HIGHEST) + bp[None, None, :]


if __name__ == "__main__":
    # Module config: dim = C = 64, depth_block_channel = N = 4, num_heads = 4.
    B, N, C, num_heads = 2, 4, 64, 4

    key = jax.random.PRNGKey(0)
    keys = jax.random.split(key, 9)
    params = dict(
        wq=jax.random.normal(keys[0], (N, 3, 3), jnp.float32) * 0.2,
        bq=jax.random.normal(keys[1], (N,), jnp.float32) * 0.1,
        wk=jax.random.normal(keys[2], (N, 3, 3), jnp.float32) * 0.2,
        bk=jax.random.normal(keys[3], (N,), jnp.float32) * 0.1,
        wv=jax.random.normal(keys[4], (N, 3, 3), jnp.float32) * 0.2,
        bv=jax.random.normal(keys[5], (N,), jnp.float32) * 0.1,
        wp=jax.random.normal(keys[6], (C, C), jnp.float32) * (1.0 / math.sqrt(C)),
        bp=jax.random.normal(keys[7], (C,), jnp.float32) * 0.1,
    )
    x = jax.random.normal(keys[8], (B, N, C), jnp.float32)

    out = jax.block_until_ready(conv_attention_forward(x, params, num_heads))
    ref = jax.block_until_ready(reference_forward(x, params, num_heads))

    err = float(jnp.max(jnp.abs(out - ref)))
    if out.shape != (B, N, C) or not (err < 1e-2):
        raise AssertionError(f"mismatch: shape={out.shape} max_abs_err={err}")
    print("KERNEL_OK")
</pallas_src>

<mosaic_0001>
module attributes {stable_mosaic.version = 11 : i64} {
  func.func @conv_attn_proj_kernel(%arg0: i32, %arg1: memref<9x8x64xf32, #tpu.memory_space<vmem>>, %arg2: memref<3x10x8x1xf32, #tpu.memory_space<vmem>>, %arg3: memref<8x8x64xf32, #tpu.memory_space<vmem>>, %arg4: memref<8x8x64xf32, #tpu.memory_space<vmem>>, %arg5: memref<1x64xf32, #tpu.memory_space<vmem>>, %arg6: memref<8x64xf32, #tpu.memory_space<vmem>>) attributes {dimension_semantics = [#tpu.dimension_semantics<arbitrary>], iteration_bounds = array<i64: 1>, scalar_prefetch = 0 : i64, scratch_operands = 0 : i64, tpu.core_type = #tpu.core_type<tc>, window_params = [{pipeline_mode = #tpu.pipeline_mode<synchronous>, transform_indices = @transform_0, window_bounds = array<i64: 9, 8, 64>}, {pipeline_mode = #tpu.pipeline_mode<synchronous>, transform_indices = @transform_1, window_bounds = array<i64: 3, 10, 8, 1>}, {pipeline_mode = #tpu.pipeline_mode<synchronous>, transform_indices = @transform_2, window_bounds = array<i64: 8, 8, 64>}, {pipeline_mode = #tpu.pipeline_mode<synchronous>, transform_indices = @transform_3, window_bounds = array<i64: 8, 8, 64>}, {pipeline_mode = #tpu.pipeline_mode<synchronous>, transform_indices = @transform_4, window_bounds = array<i64: 1, 64>}, {pipeline_mode = #tpu.pipeline_mode<synchronous>, transform_indices = @transform_5, window_bounds = array<i64: 8, 64>}]} {
    %c0 = arith.constant 0 : index
    %c0_0 = arith.constant 0 : index
    %c0_1 = arith.constant 0 : index
    %0 = vector.load %arg1[%c0, %c0_0, %c0_1] : memref<9x8x64xf32, #tpu.memory_space<vmem>>, vector<1x8x64xf32>
    %1 = vector.shape_cast %0 : vector<1x8x64xf32> to vector<8x64xf32>
    %c0_2 = arith.constant 0 : index
    %c0_3 = arith.constant 0 : index
    %c0_4 = arith.constant 0 : index
    %c0_5 = arith.constant 0 : index
    %2 = vector.load %arg2[%c0_2, %c0_3, %c0_4, %c0_5] : memref<3x10x8x1xf32, #tpu.memory_space<vmem>>, vector<1x1x8x1xf32>
    %3 = vector.shape_cast %2 : vector<1x1x8x1xf32> to vector<8x1xf32>
    %4 = vector.broadcast %3 : vector<8x1xf32> to vector<8x64xf32>
    %5 = arith.mulf %1, %4 : vector<8x64xf32>
    %c1 = arith.constant 1 : index
    %c0_6 = arith.constant 0 : index
    %c0_7 = arith.constant 0 : index
    %c0_8 = arith.constant 0 : index
    %6 = vector.load %arg2[%c1, %c0_6, %c0_7, %c0_8] : memref<3x10x8x1xf32, #tpu.memory_space<vmem>>, vector<1x1x8x1xf32>
    %7 = vector.shape_cast %6 : vector<1x1x8x1xf32> to vector<8x1xf32>
    %8 = vector.broadcast %7 : vector<8x1xf32> to vector<8x64xf32>
    %9 = arith.mulf %1, %8 : vector<8x64xf32>
    %c2 = arith.constant 2 : index
    %c0_9 = arith.constant 0 : index
    %c0_10 = arith.constant 0 : index
    %c0_11 = arith.constant 0 : index
    %10 = vector.load %arg2[%c2, %c0_9, %c0_10, %c0_11] : memref<3x10x8x1xf32, #tpu.memory_space<vmem>>, vector<1x1x8x1xf32>
    %11 = vector.shape_cast %10 : vector<1x1x8x1xf32> to vector<8x1xf32>
    %12 = vector.broadcast %11 : vector<8x1xf32> to vector<8x64xf32>
    %13 = arith.mulf %1, %12 : vector<8x64xf32>
    %c1_12 = arith.constant 1 : index
    %c0_13 = arith.constant 0 : index
    %c0_14 = arith.constant 0 : index
    %14 = vector.load %arg1[%c1_12, %c0_13, %c0_14] : memref<9x8x64xf32, #tpu.memory_space<vmem>>, vector<1x8x64xf32>
    %15 = vector.shape_cast %14 : vector<1x8x64xf32> to vector<8x64xf32>
    %c0_15 = arith.constant 0 : index
    %c1_16 = arith.constant 1 : index
    %c0_17 = arith.constant 0 : index
    %c0_18 = arith.constant 0 : index
    %16 = vector.load %arg2[%c0_15, %c1_16, %c0_17, %c0_18] : memref<3x10x8x1xf32, #tpu.memory_space<vmem>>, vector<1x1x8x1xf32>
    %17 = vector.shape_cast %16 : vector<1x1x8x1xf32> to vector<8x1xf32>
    %18 = vector.broadcast %17 : vector<8x1xf32> to vector<8x64xf32>
    %19 = arith.mulf %15, %18 : vector<8x64xf32>
    %20 = arith.addf %5, %19 : vector<8x64xf32>
    %c1_19 = arith.constant 1 : index
    %c1_20 = arith.constant 1 : index
    %c0_21 = arith.constant 0 : index
    %c0_22 = arith.constant 0 : index
    %21 = vector.load %arg2[%c1_19, %c1_20, %c0_21, %c0_22] : memref<3x10x8x1xf32, #tpu.memory_space<vmem>>, vector<1x1x8x1xf32>
    %22 = vector.shape_cast %21 : vector<1x1x8x1xf32> to vector<8x1xf32>
    %23 = vector.broadcast %22 : vector<8x1xf32> to vector<8x64xf32>
    %24 = arith.mulf %15, %23 : vector<8x64xf32>
    %25 = arith.addf %9, %24 : vector<8x64xf32>
    %c2_23 = arith.constant 2 : index
    %c1_24 = arith.constant 1 : index
    %c0_25 = arith.constant 0 : index
    %c0_26 = arith.constant 0 : index
    %26 = vector.load %arg2[%c2_23, %c1_24, %c0_25, %c0_26] : memref<3x10x8x1xf32, #tpu.memory_space<vmem>>, vector<1x1x8x1xf32>
    %27 = vector.shape_cast %26 : vector<1x1x8x1xf32> to vector<8x1xf32>
    %28 = vector.broadcast %27 : vector<8x1xf32> to vector<8x64xf32>
    %29 = arith.mulf %15, %28 : vector<8x64xf32>
    %30 = arith.addf %13, %29 : vector<8x64xf32>
    %c2_27 = arith.constant 2 : index
    %c0_28 = arith.constant 0 : index
    %c0_29 = arith.constant 0 : index
    %31 = vector.load %arg1[%c2_27, %c0_28, %c0_29] : memref<9x8x64xf32, #tpu.memory_space<vmem>>, vector<1x8x64xf32>
    %32 = vector.shape_cast %31 : vector<1x8x64xf32> to vector<8x64xf32>
    %c0_30 = arith.constant 0 : index
    %c2_31 = arith.constant 2 : index
    %c0_32 = arith.constant 0 : index
    %c0_33 = arith.constant 0 : index
    %33 = vector.load %arg2[%c0_30, %c2_31, %c0_32, %c0_33] : memref<3x10x8x1xf32, #tpu.memory_space<vmem>>, vector<1x1x8x1xf32>
    %34 = vector.shape_cast %33 : vector<1x1x8x1xf32> to vector<8x1xf32>
    %35 = vector.broadcast %34 : vector<8x1xf32> to vector<8x64xf32>
    %36 = arith.mulf %32, %35 : vector<8x64xf32>
    %37 = arith.addf %20, %36 : vector<8x64xf32>
    %c1_34 = arith.constant 1 : index
    %c2_35 = arith.constant 2 : index
    %c0_36 = arith.constant 0 : index
    %c0_37 = arith.constant 0 : index
    %38 = vector.load %arg2[%c1_34, %c2_35, %c0_36, %c0_37] : memref<3x10x8x1xf32, #tpu.memory_space<vmem>>, vector<1x1x8x1xf32>
    %39 = vector.shape_cast %38 : vector<1x1x8x1xf32> to vector<8x1xf32>
    %40 = vector.broadcast %39 : vector<8x1xf32> to vector<8x64xf32>
    %41 = arith.mulf %32, %40 : vector<8x64xf32>
    %42 = arith.addf %25, %41 : vector<8x64xf32>
    %c2_38 = arith.constant 2 : index
    %c2_39 = arith.constant 2 : index
    %c0_40 = arith.constant 0 : index
    %c0_41 = arith.constant 0 : index
    %43 = vector.load %arg2[%c2_38, %c2_39, %c0_40, %c0_41] : memref<3x10x8x1xf32, #tpu.memory_space<vmem>>, vector<1x1x8x1xf32>
    %44 = vector.shape_cast %43 : vector<1x1x8x1xf32> to vector<8x1xf32>
    %45 = vector.broadcast %44 : vector<8x1xf32> to vector<8x64xf32>
    %46 = arith.mulf %32, %45 : vector<8x64xf32>
    %47 = arith.addf %30, %46 : vector<8x64xf32>
    %c3 = arith.constant 3 : index
    %c0_42 = arith.constant 0 : index
    %c0_43 = arith.constant 0 : index
    %48 = vector.load %arg1[%c3, %c0_42, %c0_43] : memref<9x8x64xf32, #tpu.memory_space<vmem>>, vector<1x8x64xf32>
    %49 = vector.shape_cast %48 : vector<1x8x64xf32> to vector<8x64xf32>
    %c0_44 = arith.constant 0 : index
    %c3_45 = arith.constant 3 : index
    %c0_46 = arith.constant 0 : index
    %c0_47 = arith.constant 0 : index
    %50 = vector.load %arg2[%c0_44, %c3_45, %c0_46, %c0_47] : memref<3x10x8x1xf32, #tpu.memory_space<vmem>>, vector<1x1x8x1xf32>
    %51 = vector.shape_cast %50 : vector<1x1x8x1xf32> to vector<8x1xf32>
    %52 = vector.broadcast %51 : vector<8x1xf32> to vector<8x64xf32>
    %53 = arith.mulf %49, %52 : vector<8x64xf32>
    %54 = arith.addf %37, %53 : vector<8x64xf32>
    %c1_48 = arith.constant 1 : index
    %c3_49 = arith.constant 3 : index
    %c0_50 = arith.constant 0 : index
    %c0_51 = arith.constant 0 : index
    %55 = vector.load %arg2[%c1_48, %c3_49, %c0_50, %c0_51] : memref<3x10x8x1xf32, #tpu.memory_space<vmem>>, vector<1x1x8x1xf32>
    %56 = vector.shape_cast %55 : vector<1x1x8x1xf32> to vector<8x1xf32>
    %57 = vector.broadcast %56 : vector<8x1xf32> to vector<8x64xf32>
    %58 = arith.mulf %49, %57 : vector<8x64xf32>
    %59 = arith.addf %42, %58 : vector<8x64xf32>
    %c2_52 = arith.constant 2 : index
    %c3_53 = arith.constant 3 : index
    %c0_54 = arith.constant 0 : index
    %c0_55 = arith.constant 0 : index
    %60 = vector.load %arg2[%c2_52, %c3_53, %c0_54, %c0_55] : memref<3x10x8x1xf32, #tpu.memory_space<vmem>>, vector<1x1x8x1xf32>
    %61 = vector.shape_cast %60 : vector<1x1x8x1xf32> to vector<8x1xf32>
    %62 = vector.broadcast %61 : vector<8x1xf32> to vector<8x64xf32>
    %63 = arith.mulf %49, %62 : vector<8x64xf32>
    %64 = arith.addf %47, %63 : vector<8x64xf32>
    %c4 = arith.constant 4 : index
    %c0_56 = arith.constant 0 : index
    %c0_57 = arith.constant 0 : index
    %65 = vector.load %arg1[%c4, %c0_56, %c0_57] : memref<9x8x64xf32, #tpu.memory_space<vmem>>, vector<1x8x64xf32>
    %66 = vector.shape_cast %65 : vector<1x8x64xf32> to vector<8x64xf32>
    %c0_58 = arith.constant 0 : index
    %c4_59 = arith.constant 4 : index
    %c0_60 = arith.constant 0 : index
    %c0_61 = arith.constant 0 : index
    %67 = vector.load %arg2[%c0_58, %c4_59, %c0_60, %c0_61] : memref<3x10x8x1xf32, #tpu.memory_space<vmem>>, vector<1x1x8x1xf32>
    %68 = vector.shape_cast %67 : vector<1x1x8x1xf32> to vector<8x1xf32>
    %69 = vector.broadcast %68 : vector<8x1xf32> to vector<8x64xf32>
    %70 = arith.mulf %66, %69 : vector<8x64xf32>
    %71 = arith.addf %54, %70 : vector<8x64xf32>
    %c1_62 = arith.constant 1 : index
    %c4_63 = arith.constant 4 : index
    %c0_64 = arith.constant 0 : index
    %c0_65 = arith.constant 0 : index
    %72 = vector.load %arg2[%c1_62, %c4_63, %c0_64, %c0_65] : memref<3x10x8x1xf32, #tpu.memory_space<vmem>>, vector<1x1x8x1xf32>
    %73 = vector.shape_cast %72 : vector<1x1x8x1xf32> to vector<8x1xf32>
    %74 = vector.broadcast %73 : vector<8x1xf32> to vector<8x64xf32>
    %75 = arith.mulf %66, %74 : vector<8x64xf32>
    %76 = arith.addf %59, %75 : vector<8x64xf32>
    %c2_66 = arith.constant 2 : index
    %c4_67 = arith.constant 4 : index
    %c0_68 = arith.constant 0 : index
    %c0_69 = arith.constant 0 : index
    %77 = vector.load %arg2[%c2_66, %c4_67, %c0_68, %c0_69] : memref<3x10x8x1xf32, #tpu.memory_space<vmem>>, vector<1x1x8x1xf32>
    %78 = vector.shape_cast %77 : vector<1x1x8x1xf32> to vector<8x1xf32>
    %79 = vector.broadcast %78 : vector<8x1xf32> to vector<8x64xf32>
    %80 = arith.mulf %66, %79 : vector<8x64xf32>
    %81 = arith.addf %64, %80 : vector<8x64xf32>
    %c5 = arith.constant 5 : index
    %c0_70 = arith.constant 0 : index
    %c0_71 = arith.constant 0 : index
    %82 = vector.load %arg1[%c5, %c0_70, %c0_71] : memref<9x8x64xf32, #tpu.memory_space<vmem>>, vector<1x8x64xf32>
    %83 = vector.shape_cast %82 : vector<1x8x64xf32> to vector<8x64xf32>
    %c0_72 = arith.constant 0 : index
    %c5_73 = arith.constant 5 : index
    %c0_74 = arith.constant 0 : index
    %c0_75 = arith.constant 0 : index
    %84 = vector.load %arg2[%c0_72, %c5_73, %c0_74, %c0_75] : memref<3x10x8x1xf32, #tpu.memory_space<vmem>>, vector<1x1x8x1xf32>
    %85 = vector.shape_cast %84 : vector<1x1x8x1xf32> to vector<8x1xf32>
    %86 = vector.broadcast %85 : vector<8x1xf32> to vector<8x64xf32>
    %87 = arith.mulf %83, %86 : vector<8x64xf32>
    %88 = arith.addf %71, %87 : vector<8x64xf32>
    %c1_76 = arith.constant 1 : index
    %c5_77 = arith.constant 5 : index
    %c0_78 = arith.constant 0 : index
    %c0_79 = arith.constant 0 : index
    %89 = vector.load %arg2[%c1_76, %c5_77, %c0_78, %c0_79] : memref<3x10x8x1xf32, #tpu.memory_space<vmem>>, vector<1x1x8x1xf32>
    %90 = vector.shape_cast %89 : vector<1x1x8x1xf32> to vector<8x1xf32>
    %91 = vector.broadcast %90 : vector<8x1xf32> to vector<8x64xf32>
    %92 = arith.mulf %83, %91 : vector<8x64xf32>
    %93 = arith.addf %76, %92 : vector<8x64xf32>
    %c2_80 = arith.constant 2 : index
    %c5_81 = arith.constant 5 : index
    %c0_82 = arith.constant 0 : index
    %c0_83 = arith.constant 0 : index
    %94 = vector.load %arg2[%c2_80, %c5_81, %c0_82, %c0_83] : memref<3x10x8x1xf32, #tpu.memory_space<vmem>>, vector<1x1x8x1xf32>
    %95 = vector.shape_cast %94 : vector<1x1x8x1xf32> to vector<8x1xf32>
    %96 = vector.broadcast %95 : vector<8x1xf32> to vector<8x64xf32>
    %97 = arith.mulf %83, %96 : vector<8x64xf32>
    %98 = arith.addf %81, %97 : vector<8x64xf32>
    %c6 = arith.constant 6 : index
    %c0_84 = arith.constant 0 : index
    %c0_85 = arith.constant 0 : index
    %99 = vector.load %arg1[%c6, %c0_84, %c0_85] : memref<9x8x64xf32, #tpu.memory_space<vmem>>, vector<1x8x64xf32>
    %100 = vector.shape_cast %99 : vector<1x8x64xf32> to vector<8x64xf32>
    %c0_86 = arith.constant 0 : index
    %c6_87 = arith.constant 6 : index
    %c0_88 = arith.constant 0 : index
    %c0_89 = arith.constant 0 : index
    %101 = vector.load %arg2[%c0_86, %c6_87, %c0_88, %c0_89] : memref<3x10x8x1xf32, #tpu.memory_space<vmem>>, vector<1x1x8x1xf32>
    %102 = vector.shape_cast %101 : vector<1x1x8x1xf32> to vector<8x1xf32>
    %103 = vector.broadcast %102 : vector<8x1xf32> to vector<8x64xf32>
    %104 = arith.mulf %100, %103 : vector<8x64xf32>
    %105 = arith.addf %88, %104 : vector<8x64xf32>
    %c1_90 = arith.constant 1 : index
    %c6_91 = arith.constant 6 : index
    %c0_92 = arith.constant 0 : index
    %c0_93 = arith.constant 0 : index
    %106 = vector.load %arg2[%c1_90, %c6_91, %c0_92, %c0_93] : memref<3x10x8x1xf32, #tpu.memory_space<vmem>>, vector<1x1x8x1xf32>
    %107 = vector.shape_cast %106 : vector<1x1x8x1xf32> to vector<8x1xf32>
    %108 = vector.broadcast %107 : vector<8x1xf32> to vector<8x64xf32>
    %109 = arith.mulf %100, %108 : vector<8x64xf32>
    %110 = arith.addf %93, %109 : vector<8x64xf32>
    %c2_94 = arith.constant 2 : index
    %c6_95 = arith.constant 6 : index
    %c0_96 = arith.constant 0 : index
    %c0_97 = arith.constant 0 : index
    %111 = vector.load %arg2[%c2_94, %c6_95, %c0_96, %c0_97] : memref<3x10x8x1xf32, #tpu.memory_space<vmem>>, vector<1x1x8x1xf32>
    %112 = vector.shape_cast %111 : vector<1x1x8x1xf32> to vector<8x1xf32>
    %113 = vector.broadcast %112 : vector<8x1xf32> to vector<8x64xf32>
    %114 = arith.mulf %100, %113 : vector<8x64xf32>
    %115 = arith.addf %98, %114 : vector<8x64xf32>
    %c7 = arith.constant 7 : index
    %c0_98 = arith.constant 0 : index
    %c0_99 = arith.constant 0 : index
    %116 = vector.load %arg1[%c7, %c0_98, %c0_99] : memref<9x8x64xf32, #tpu.memory_space<vmem>>, vector<1x8x64xf32>
    %117 = vector.shape_cast %116 : vector<1x8x64xf32> to vector<8x64xf32>
    %c0_100 = arith.constant 0 : index
    %c7_101 = arith.constant 7 : index
    %c0_102 = arith.constant 0 : index
    %c0_103 = arith.constant 0 : index
    %118 = vector.load %arg2[%c0_100, %c7_101, %c0_102, %c0_103] : memref<3x10x8x1xf32, #tpu.memory_space<vmem>>, vector<1x1x8x1xf32>
    %119 = vector.shape_cast %118 : vector<1x1x8x1xf32> to vector<8x1xf32>
    %120 = vector.broadcast %119 : vector<8x1xf32> to vector<8x64xf32>
    %121 = arith.mulf %117, %120 : vector<8x64xf32>
    %122 = arith.addf %105, %121 : vector<8x64xf32>
    %c1_104 = arith.constant 1 : index
    %c7_105 = arith.constant 7 : index
    %c0_106 = arith.constant 0 : index
    %c0_107 = arith.constant 0 : index
    %123 = vector.load %arg2[%c1_104, %c7_105, %c0_106, %c0_107] : memref<3x10x8x1xf32, #tpu.memory_space<vmem>>, vector<1x1x8x1xf32>
    %124 = vector.shape_cast %123 : vector<1x1x8x1xf32> to vector<8x1xf32>
    %125 = vector.broadcast %124 : vector<8x1xf32> to vector<8x64xf32>
    %126 = arith.mulf %117, %125 : vector<8x64xf32>
    %127 = arith.addf %110, %126 : vector<8x64xf32>
    %c2_108 = arith.constant 2 : index
    %c7_109 = arith.constant 7 : index
    %c0_110 = arith.constant 0 : index
    %c0_111 = arith.constant 0 : index
    %128 = vector.load %arg2[%c2_108, %c7_109, %c0_110, %c0_111] : memref<3x10x8x1xf32, #tpu.memory_space<vmem>>, vector<1x1x8x1xf32>
    %129 = vector.shape_cast %128 : vector<1x1x8x1xf32> to vector<8x1xf32>
    %130 = vector.broadcast %129 : vector<8x1xf32> to vector<8x64xf32>
    %131 = arith.mulf %117, %130 : vector<8x64xf32>
    %132 = arith.addf %115, %131 : vector<8x64xf32>
    %c8 = arith.constant 8 : index
    %c0_112 = arith.constant 0 : index
    %c0_113 = arith.constant 0 : index
    %133 = vector.load %arg1[%c8, %c0_112, %c0_113] : memref<9x8x64xf32, #tpu.memory_space<vmem>>, vector<1x8x64xf32>
    %134 = vector.shape_cast %133 : vector<1x8x64xf32> to vector<8x64xf32>
    %c0_114 = arith.constant 0 : index
    %c8_115 = arith.constant 8 : index
    %c0_116 = arith.constant 0 : index
    %c0_117 = arith.constant 0 : index
    %135 = vector.load %arg2[%c0_114, %c8_115, %c0_116, %c0_117] : memref<3x10x8x1xf32, #tpu.memory_space<vmem>>, vector<1x1x8x1xf32>
    %136 = vector.shape_cast %135 : vector<1x1x8x1xf32> to vector<8x1xf32>
    %137 = vector.broadcast %136 : vector<8x1xf32> to vector<8x64xf32>
    %138 = arith.mulf %134, %137 : vector<8x64xf32>
    %139 = arith.addf %122, %138 : vector<8x64xf32>
    %c1_118 = arith.constant 1 : index
    %c8_119 = arith.constant 8 : index
    %c0_120 = arith.constant 0 : index
    %c0_121 = arith.constant 0 : index
    %140 = vector.load %arg2[%c1_118, %c8_119, %c0_120, %c0_121] : memref<3x10x8x1xf32, #tpu.memory_space<vmem>>, vector<1x1x8x1xf32>
    %141 = vector.shape_cast %140 : vector<1x1x8x1xf32> to vector<8x1xf32>
    %142 = vector.broadcast %141 : vector<8x1xf32> to vector<8x64xf32>
    %143 = arith.mulf %134, %142 : vector<8x64xf32>
    %144 = arith.addf %127, %143 : vector<8x64xf32>
    %c2_122 = arith.constant 2 : index
    %c8_123 = arith.constant 8 : index
    %c0_124 = arith.constant 0 : index
    %c0_125 = arith.constant 0 : index
    %145 = vector.load %arg2[%c2_122, %c8_123, %c0_124, %c0_125] : memref<3x10x8x1xf32, #tpu.memory_space<vmem>>, vector<1x1x8x1xf32>
    %146 = vector.shape_cast %145 : vector<1x1x8x1xf32> to vector<8x1xf32>
    %147 = vector.broadcast %146 : vector<8x1xf32> to vector<8x64xf32>
    %148 = arith.mulf %134, %147 : vector<8x64xf32>
    %149 = arith.addf %132, %148 : vector<8x64xf32>
    %c0_126 = arith.constant 0 : index
    %c9 = arith.constant 9 : index
    %c0_127 = arith.constant 0 : index
    %c0_128 = arith.constant 0 : index
    %150 = vector.load %arg2[%c0_126, %c9, %c0_127, %c0_128] : memref<3x10x8x1xf32, #tpu.memory_space<vmem>>, vector<1x1x8x1xf32>
    %151 = vector.shape_cast %150 : vector<1x1x8x1xf32> to vector<8x1xf32>
    %152 = vector.broadcast %151 : vector<8x1xf32> to vector<8x64xf32>
    %153 = arith.addf %139, %152 : vector<8x64xf32>
    %c1_129 = arith.constant 1 : index
    %c9_130 = arith.constant 9 : index
    %c0_131 = arith.constant 0 : index
    %c0_132 = arith.constant 0 : index
    %154 = vector.load %arg2[%c1_129, %c9_130, %c0_131, %c0_132] : memref<3x10x8x1xf32, #tpu.memory_space<vmem>>, vector<1x1x8x1xf32>
    %155 = vector.shape_cast %154 : vector<1x1x8x1xf32> to vector<8x1xf32>
    %156 = vector.broadcast %155 : vector<8x1xf32> to vector<8x64xf32>
    %157 = arith.addf %144, %156 : vector<8x64xf32>
    %c2_133 = arith.constant 2 : index
    %c9_134 = arith.constant 9 : index
    %c0_135 = arith.constant 0 : index
    %c0_136 = arith.constant 0 : index
    %158 = vector.load %arg2[%c2_133, %c9_134, %c0_135, %c0_136] : memref<3x10x8x1xf32, #tpu.memory_space<vmem>>, vector<1x1x8x1xf32>
    %159 = vector.shape_cast %158 : vector<1x1x8x1xf32> to vector<8x1xf32>
    %160 = vector.broadcast %159 : vector<8x1xf32> to vector<8x64xf32>
    %161 = arith.addf %149, %160 : vector<8x64xf32>
    %162 = vector.extract_strided_slice %153 {offsets = [0, 0], sizes = [8, 8], strides = [1, 1]} : vector<8x64xf32> to vector<8x8xf32>
    %163 = vector.extract_strided_slice %153 {offsets = [0, 8], sizes = [8, 8], strides = [1, 1]} : vector<8x64xf32> to vector<8x8xf32>
    %164 = vector.extract_strided_slice %153 {offsets = [0, 16], sizes = [8, 8], strides = [1, 1]} : vector<8x64xf32> to vector<8x8xf32>
    %165 = vector.extract_strided_slice %153 {offsets = [0, 24], sizes = [8, 8], strides = [1, 1]} : vector<8x64xf32> to vector<8x8xf32>
    %166 = vector.extract_strided_slice %153 {offsets = [0, 32], sizes = [8, 8], strides = [1, 1]} : vector<8x64xf32> to vector<8x8xf32>
    %167 = vector.extract_strided_slice %153 {offsets = [0, 40], sizes = [8, 8], strides = [1, 1]} : vector<8x64xf32> to vector<8x8xf32>
    %168 = vector.extract_strided_slice %153 {offsets = [0, 48], sizes = [8, 8], strides = [1, 1]} : vector<8x64xf32> to vector<8x8xf32>
    %169 = vector.extract_strided_slice %153 {offsets = [0, 56], sizes = [8, 8], strides = [1, 1]} : vector<8x64xf32> to vector<8x8xf32>
    %170 = tpu.concatenate %162, %163, %164, %165, %166, %167, %168, %169 in 0 : vector<8x8xf32>, vector<8x8xf32>, vector<8x8xf32>, vector<8x8xf32>, vector<8x8xf32>, vector<8x8xf32>, vector<8x8xf32>, vector<8x8xf32> -> vector<64x8xf32>
    %171 = vector.extract_strided_slice %157 {offsets = [0, 0], sizes = [8, 8], strides = [1, 1]} : vector<8x64xf32> to vector<8x8xf32>
    %172 = vector.extract_strided_slice %157 {offsets = [0, 8], sizes = [8, 8], strides = [1, 1]} : vector<8x64xf32> to vector<8x8xf32>
    %173 = vector.extract_strided_slice %157 {offsets = [0, 16], sizes = [8, 8], strides = [1, 1]} : vector<8x64xf32> to vector<8x8xf32>
    %174 = vector.extract_strided_slice %157 {offsets = [0, 24], sizes = [8, 8], strides = [1, 1]} : vector<8x64xf32> to vector<8x8xf32>
    %175 = vector.extract_strided_slice %157 {offsets = [0, 32], sizes = [8, 8], strides = [1, 1]} : vector<8x64xf32> to vector<8x8xf32>
    %176 = vector.extract_strided_slice %157 {offsets = [0, 40], sizes = [8, 8], strides = [1, 1]} : vector<8x64xf32> to vector<8x8xf32>
    %177 = vector.extract_strided_slice %157 {offsets = [0, 48], sizes = [8, 8], strides = [1, 1]} : vector<8x64xf32> to vector<8x8xf32>
    %178 = vector.extract_strided_slice %157 {offsets = [0, 56], sizes = [8, 8], strides = [1, 1]} : vector<8x64xf32> to vector<8x8xf32>
    %179 = tpu.concatenate %171, %172, %173, %174, %175, %176, %177, %178 in 0 : vector<8x8xf32>, vector<8x8xf32>, vector<8x8xf32>, vector<8x8xf32>, vector<8x8xf32>, vector<8x8xf32>, vector<8x8xf32>, vector<8x8xf32> -> vector<64x8xf32>
    %180 = vector.extract_strided_slice %161 {offsets = [0, 0], sizes = [8, 8], strides = [1, 1]} : vector<8x64xf32> to vector<8x8xf32>
    %181 = vector.extract_strided_slice %161 {offsets = [0, 8], sizes = [8, 8], strides = [1, 1]} : vector<8x64xf32> to vector<8x8xf32>
    %182 = vector.extract_strided_slice %161 {offsets = [0, 16], sizes = [8, 8], strides = [1, 1]} : vector<8x64xf32> to vector<8x8xf32>
    %183 = vector.extract_strided_slice %161 {offsets = [0, 24], sizes = [8, 8], strides = [1, 1]} : vector<8x64xf32> to vector<8x8xf32>
    %184 = vector.extract_strided_slice %161 {offsets = [0, 32], sizes = [8, 8], strides = [1, 1]} : vector<8x64xf32> to vector<8x8xf32>
    %185 = vector.extract_strided_slice %161 {offsets = [0, 40], sizes = [8, 8], strides = [1, 1]} : vector<8x64xf32> to vector<8x8xf32>
    %186 = vector.extract_strided_slice %161 {offsets = [0, 48], sizes = [8, 8], strides = [1, 1]} : vector<8x64xf32> to vector<8x8xf32>
    %187 = vector.extract_strided_slice %161 {offsets = [0, 56], sizes = [8, 8], strides = [1, 1]} : vector<8x64xf32> to vector<8x8xf32>
    %188 = tpu.concatenate %180, %181, %182, %183, %184, %185, %186, %187 in 0 : vector<8x8xf32>, vector<8x8xf32>, vector<8x8xf32>, vector<8x8xf32>, vector<8x8xf32>, vector<8x8xf32>, vector<8x8xf32>, vector<8x8xf32> -> vector<64x8xf32>
    %189 = arith.truncf %170 : vector<64x8xf32> to vector<64x8xbf16>
    %190 = arith.truncf %179 : vector<64x8xf32> to vector<64x8xbf16>
    %cst = arith.constant dense<0.000000e+00> : vector<64x64xf32>
    %191 = tpu.matmul %189, %190, %cst {dimension_numbers = #tpu.dot_dimension_numbers<[1], [1], [0], [0], [0, 0, 1, 0], [], []>} : vector<64x8xbf16>, vector<64x8xbf16>, vector<64x64xf32> -> vector<64x64xf32>
    %192 = tpu.iota {dimensions = array<i32: 0>} : vector<64x64xi32>
    %193 = tpu.iota {dimensions = array<i32: 1>} : vector<64x64xi32>
    %c8_i32 = arith.constant 8 : i32
    %c0_i32 = arith.constant 0 : i32
    %194 = arith.cmpi eq, %c8_i32, %c0_i32 : i32
    %c1_i32 = arith.constant 1 : i32
    %195 = arith.select %194, %c1_i32, %c8_i32 : i32
    %196 = vector.broadcast %195 : i32 to vector<64x64xi32>
    %197 = arith.remsi %192, %196 : vector<64x64xi32>
    %c0_i32_137 = arith.constant 0 : i32
    %198 = vector.broadcast %c0_i32_137 : i32 to vector<64x64xi32>
    %199 = arith.cmpi ne, %197, %198 : vector<64x64xi32>
    %c0_i32_138 = arith.constant 0 : i32
    %200 = vector.broadcast %c0_i32_138 : i32 to vector<64x64xi32>
    %201 = arith.cmpi slt, %197, %200 : vector<64x64xi32>
    %c0_i32_139 = arith.constant 0 : i32
    %202 = arith.cmpi slt, %195, %c0_i32_139 : i32
    %203 = vector.broadcast %202 : i1 to vector<64x64xi1>
    %204 = vector.broadcast %203 : vector<64x64xi1> to vector<64x64xi1>
    %205 = arith.xori %201, %204 : vector<64x64xi1>
    %206 = arith.andi %205, %199 : vector<64x64xi1>
    %207 = vector.broadcast %195 : i32 to vector<64x64xi32>
    %208 = arith.addi %197, %207 : vector<64x64xi32>
    %209 = arith.select %206, %208, %197 : vector<64x64xi1>, vector<64x64xi32>
    %c8_i32_140 = arith.constant 8 : i32
    %c0_i32_141 = arith.constant 0 : i32
    %210 = arith.cmpi eq, %c8_i32_140, %c0_i32_141 : i32
    %c1_i32_142 = arith.constant 1 : i32
    %211 = arith.select %210, %c1_i32_142, %c8_i32_140 : i32
    %212 = vector.broadcast %211 : i32 to vector<64x64xi32>
    %213 = arith.remsi %193, %212 : vector<64x64xi32>
    %c0_i32_143 = arith.constant 0 : i32
    %214 = vector.broadcast %c0_i32_143 : i32 to vector<64x64xi32>
    %215 = arith.cmpi ne, %213, %214 : vector<64x64xi32>
    %c0_i32_144 = arith.constant 0 : i32
    %216 = vector.broadcast %c0_i32_144 : i32 to vector<64x64xi32>
    %217 = arith.cmpi slt, %213, %216 : vector<64x64xi32>
    %c0_i32_145 = arith.constant 0 : i32
    %218 = arith.cmpi slt, %211, %c0_i32_145 : i32
    %219 = vector.broadcast %218 : i1 to vector<64x64xi1>
    %220 = vector.broadcast %219 : vector<64x64xi1> to vector<64x64xi1>
    %221 = arith.xori %217, %220 : vector<64x64xi1>
    %222 = arith.andi %221, %215 : vector<64x64xi1>
    %223 = vector.broadcast %211 : i32 to vector<64x64xi32>
    %224 = arith.addi %213, %223 : vector<64x64xi32>
    %225 = arith.select %222, %224, %213 : vector<64x64xi1>, vector<64x64xi32>
    %226 = arith.cmpi eq, %209, %225 : vector<64x64xi32>
    %cst_146 = arith.constant -1.000000e+30 : f32
    %227 = vector.broadcast %cst_146 : f32 to vector<64x64xf32>
    %228 = arith.select %226, %191, %227 : vector<64x64xi1>, vector<64x64xf32>
    %cst_147 = arith.constant dense<0xFF800000> : vector<64xf32>
    %229 = vector.multi_reduction <maximumf>, %228, %cst_147 [1] : vector<64x64xf32> to vector<64xf32>
    %230 = vector.shape_cast %229 : vector<64xf32> to vector<64x1xf32>
    %231 = vector.broadcast %230 : vector<64x1xf32> to vector<64x64xf32>
    %232 = arith.subf %228, %231 : vector<64x64xf32>
    %233 = math.exp %232 : vector<64x64xf32>
    %cst_148 = arith.constant dense<0.000000e+00> : vector<64xf32>
    %234 = vector.multi_reduction <add>, %233, %cst_148 [1] : vector<64x64xf32> to vector<64xf32>
    %235 = vector.shape_cast %234 : vector<64xf32> to vector<64x1xf32>
    %236 = vector.broadcast %235 : vector<64x1xf32> to vector<64x64xf32>
    %237 = arith.divf %233, %236 : vector<64x64xf32>
    %238 = arith.truncf %237 : vector<64x64xf32> to vector<64x64xbf16>
    %239 = arith.truncf %188 : vector<64x8xf32> to vector<64x8xbf16>
    %cst_149 = arith.constant dense<0.000000e+00> : vector<64x8xf32>
    %240 = tpu.matmul %238, %239, %cst_149 {dimension_numbers = #tpu.dot_dimension_numbers<[1], [0], [0], [1], [0, 0, 1, 1], [], []>} : vector<64x64xbf16>, vector<64x8xbf16>, vector<64x8xf32> -> vector<64x8xf32>
    %cst_150 = arith.constant 0.000000e+00 : f32
    %241 = vector.broadcast %cst_150 : f32 to vector<8x64xf32>
    %c0_151 = arith.constant 0 : index
    %c0_152 = arith.constant 0 : index
    %c0_153 = arith.constant 0 : index
    %242 = vector.load %arg3[%c0_151, %c0_152, %c0_153] : memref<8x8x64xf32, #tpu.memory_space<vmem>>, vector<1x8x64xf32>
    %243 = vector.shape_cast %242 : vector<1x8x64xf32> to vector<8x64xf32>
    %cst_154 = arith.constant dense<0.000000e+00> : vector<8x8xf32>
    %244 = tpu.matmul %243, %240, %cst_154 {dimension_numbers = #tpu.dot_dimension_numbers<[1], [0], [0], [1], [0, 0, 1, 1], [], []>} : vector<8x64xf32>, vector<64x8xf32>, vector<8x8xf32> -> vector<8x8xf32>
    %c0_155 = arith.constant 0 : index
    %c0_156 = arith.constant 0 : index
    %c0_157 = arith.constant 0 : index
    %245 = vector.load %arg4[%c0_155, %c0_156, %c0_157] : memref<8x8x64xf32, #tpu.memory_space<vmem>>, vector<1x8x64xf32>
    %246 = vector.shape_cast %245 : vector<1x8x64xf32> to vector<8x64xf32>
    %cst_158 = arith.constant dense<0.000000e+00> : vector<8x64xf32>
    %247 = tpu.matmul %244, %246, %cst_158 {dimension_numbers = #tpu.dot_dimension_numbers<[1], [0], [0], [1], [0, 0, 1, 1], [], []>} : vector<8x8xf32>, vector<8x64xf32>, vector<8x64xf32> -> vector<8x64xf32>
    %248 = arith.addf %241, %247 : vector<8x64xf32>
    %c1_159 = arith.constant 1 : index
    %c0_160 = arith.constant 0 : index
    %c0_161 = arith.constant 0 : index
    %249 = vector.load %arg3[%c1_159, %c0_160, %c0_161] : memref<8x8x64xf32, #tpu.memory_space<vmem>>, vector<1x8x64xf32>
    %250 = vector.shape_cast %249 : vector<1x8x64xf32> to vector<8x64xf32>
    %cst_162 = arith.constant dense<0.000000e+00> : vector<8x8xf32>
    %251 = tpu.matmul %250, %240, %cst_162 {dimension_numbers = #tpu.dot_dimension_numbers<[1], [0], [0], [1], [0, 0, 1, 1], [], []>} : vector<8x64xf32>, vector<64x8xf32>, vector<8x8xf32> -> vector<8x8xf32>
    %c1_163 = arith.constant 1 : index
    %c0_164 = arith.constant 0 : index
    %c0_165 = arith.constant 0 : index
    %252 = vector.load %arg4[%c1_163, %c0_164, %c0_165] : memref<8x8x64xf32, #tpu.memory_space<vmem>>, vector<1x8x64xf32>
    %253 = vector.shape_cast %252 : vector<1x8x64xf32> to vector<8x64xf32>
    %cst_166 = arith.constant dense<0.000000e+00> : vector<8x64xf32>
    %254 = tpu.matmul %251, %253, %cst_166 {dimension_numbers = #tpu.dot_dimension_numbers<[1], [0], [0], [1], [0, 0, 1, 1], [], []>} : vector<8x8xf32>, vector<8x64xf32>, vector<8x64xf32> -> vector<8x64xf32>
    %255 = arith.addf %248, %254 : vector<8x64xf32>
    %c2_167 = arith.constant 2 : index
    %c0_168 = arith.constant 0 : index
    %c0_169 = arith.constant 0 : index
    %256 = vector.load %arg3[%c2_167, %c0_168, %c0_169] : memref<8x8x64xf32, #tpu.memory_space<vmem>>, vector<1x8x64xf32>
    %257 = vector.shape_cast %256 : vector<1x8x64xf32> to vector<8x64xf32>
    %cst_170 = arith.constant dense<0.000000e+00> : vector<8x8xf32>
    %258 = tpu.matmul %257, %240, %cst_170 {dimension_numbers = #tpu.dot_dimension_numbers<[1], [0], [0], [1], [0, 0, 1, 1], [], []>} : vector<8x64xf32>, vector<64x8xf32>, vector<8x8xf32> -> vector<8x8xf32>
    %c2_171 = arith.constant 2 : index
    %c0_172 = arith.constant 0 : index
    %c0_173 = arith.constant 0 : index
    %259 = vector.load %arg4[%c2_171, %c0_172, %c0_173] : memref<8x8x64xf32, #tpu.memory_space<vmem>>, vector<1x8x64xf32>
    %260 = vector.shape_cast %259 : vector<1x8x64xf32> to vector<8x64xf32>
    %cst_174 = arith.constant dense<0.000000e+00> : vector<8x64xf32>
    %261 = tpu.matmul %258, %260, %cst_174 {dimension_numbers = #tpu.dot_dimension_numbers<[1], [0], [0], [1], [0, 0, 1, 1], [], []>} : vector<8x8xf32>, vector<8x64xf32>, vector<8x64xf32> -> vector<8x64xf32>
    %262 = arith.addf %255, %261 : vector<8x64xf32>
    %c3_175 = arith.constant 3 : index
    %c0_176 = arith.constant 0 : index
    %c0_177 = arith.constant 0 : index
    %263 = vector.load %arg3[%c3_175, %c0_176, %c0_177] : memref<8x8x64xf32, #tpu.memory_space<vmem>>, vector<1x8x64xf32>
    %264 = vector.shape_cast %263 : vector<1x8x64xf32> to vector<8x64xf32>
    %cst_178 = arith.constant dense<0.000000e+00> : vector<8x8xf32>
    %265 = tpu.matmul %264, %240, %cst_178 {dimension_numbers = #tpu.dot_dimension_numbers<[1], [0], [0], [1], [0, 0, 1, 1], [], []>} : vector<8x64xf32>, vector<64x8xf32>, vector<8x8xf32> -> vector<8x8xf32>
    %c3_179 = arith.constant 3 : index
    %c0_180 = arith.constant 0 : index
    %c0_181 = arith.constant 0 : index
    %266 = vector.load %arg4[%c3_179, %c0_180, %c0_181] : memref<8x8x64xf32, #tpu.memory_space<vmem>>, vector<1x8x64xf32>
    %267 = vector.shape_cast %266 : vector<1x8x64xf32> to vector<8x64xf32>
    %cst_182 = arith.constant dense<0.000000e+00> : vector<8x64xf32>
    %268 = tpu.matmul %265, %267, %cst_182 {dimension_numbers = #tpu.dot_dimension_numbers<[1], [0], [0], [1], [0, 0, 1, 1], [], []>} : vector<8x8xf32>, vector<8x64xf32>, vector<8x64xf32> -> vector<8x64xf32>
    %269 = arith.addf %262, %268 : vector<8x64xf32>
    %c4_183 = arith.constant 4 : index
    %c0_184 = arith.constant 0 : index
    %c0_185 = arith.constant 0 : index
    %270 = vector.load %arg3[%c4_183, %c0_184, %c0_185] : memref<8x8x64xf32, #tpu.memory_space<vmem>>, vector<1x8x64xf32>
    %271 = vector.shape_cast %270 : vector<1x8x64xf32> to vector<8x64xf32>
    %cst_186 = arith.constant dense<0.000000e+00> : vector<8x8xf32>
    %272 = tpu.matmul %271, %240, %cst_186 {dimension_numbers = #tpu.dot_dimension_numbers<[1], [0], [0], [1], [0, 0, 1, 1], [], []>} : vector<8x64xf32>, vector<64x8xf32>, vector<8x8xf32> -> vector<8x8xf32>
    %c4_187 = arith.constant 4 : index
    %c0_188 = arith.constant 0 : index
    %c0_189 = arith.constant 0 : index
    %273 = vector.load %arg4[%c4_187, %c0_188, %c0_189] : memref<8x8x64xf32, #tpu.memory_space<vmem>>, vector<1x8x64xf32>
    %274 = vector.shape_cast %273 : vector<1x8x64xf32> to vector<8x64xf32>
    %cst_190 = arith.constant dense<0.000000e+00> : vector<8x64xf32>
    %275 = tpu.matmul %272, %274, %cst_190 {dimension_numbers = #tpu.dot_dimension_numbers<[1], [0], [0], [1], [0, 0, 1, 1], [], []>} : vector<8x8xf32>, vector<8x64xf32>, vector<8x64xf32> -> vector<8x64xf32>
    %276 = arith.addf %269, %275 : vector<8x64xf32>
    %c5_191 = arith.constant 5 : index
    %c0_192 = arith.constant 0 : index
    %c0_193 = arith.constant 0 : index
    %277 = vector.load %arg3[%c5_191, %c0_192, %c0_193] : memref<8x8x64xf32, #tpu.memory_space<vmem>>, vector<1x8x64xf32>
    %278 = vector.shape_cast %277 : vector<1x8x64xf32> to vector<8x64xf32>
    %cst_194 = arith.constant dense<0.000000e+00> : vector<8x8xf32>
    %279 = tpu.matmul %278, %240, %cst_194 {dimension_numbers = #tpu.dot_dimension_numbers<[1], [0], [0], [1], [0, 0, 1, 1], [], []>} : vector<8x64xf32>, vector<64x8xf32>, vector<8x8xf32> -> vector<8x8xf32>
    %c5_195 = arith.constant 5 : index
    %c0_196 = arith.constant 0 : index
    %c0_197 = arith.constant 0 : index
    %280 = vector.load %arg4[%c5_195, %c0_196, %c0_197] : memref<8x8x64xf32, #tpu.memory_space<vmem>>, vector<1x8x64xf32>
    %281 = vector.shape_cast %280 : vector<1x8x64xf32> to vector<8x64xf32>
    %cst_198 = arith.constant dense<0.000000e+00> : vector<8x64xf32>
    %282 = tpu.matmul %279, %281, %cst_198 {dimension_numbers = #tpu.dot_dimension_numbers<[1], [0], [0], [1], [0, 0, 1, 1], [], []>} : vector<8x8xf32>, vector<8x64xf32>, vector<8x64xf32> -> vector<8x64xf32>
    %283 = arith.addf %276, %282 : vector<8x64xf32>
    %c6_199 = arith.constant 6 : index
    %c0_200 = arith.constant 0 : index
    %c0_201 = arith.constant 0 : index
    %284 = vector.load %arg3[%c6_199, %c0_200, %c0_201] : memref<8x8x64xf32, #tpu.memory_space<vmem>>, vector<1x8x64xf32>
    %285 = vector.shape_cast %284 : vector<1x8x64xf32> to vector<8x64xf32>
    %cst_202 = arith.constant dense<0.000000e+00> : vector<8x8xf32>
    %286 = tpu.matmul %285, %240, %cst_202 {dimension_numbers = #tpu.dot_dimension_numbers<[1], [0], [0], [1], [0, 0, 1, 1], [], []>} : vector<8x64xf32>, vector<64x8xf32>, vector<8x8xf32> -> vector<8x8xf32>
    %c6_203 = arith.constant 6 : index
    %c0_204 = arith.constant 0 : index
    %c0_205 = arith.constant 0 : index
    %287 = vector.load %arg4[%c6_203, %c0_204, %c0_205] : memref<8x8x64xf32, #tpu.memory_space<vmem>>, vector<1x8x64xf32>
    %288 = vector.shape_cast %287 : vector<1x8x64xf32> to vector<8x64xf32>
    %cst_206 = arith.constant dense<0.000000e+00> : vector<8x64xf32>
    %289 = tpu.matmul %286, %288, %cst_206 {dimension_numbers = #tpu.dot_dimension_numbers<[1], [0], [0], [1], [0, 0, 1, 1], [], []>} : vector<8x8xf32>, vector<8x64xf32>, vector<8x64xf32> -> vector<8x64xf32>
    %290 = arith.addf %283, %289 : vector<8x64xf32>
    %c7_207 = arith.constant 7 : index
    %c0_208 = arith.constant 0 : index
    %c0_209 = arith.constant 0 : index
    %291 = vector.load %arg3[%c7_207, %c0_208, %c0_209] : memref<8x8x64xf32, #tpu.memory_space<vmem>>, vector<1x8x64xf32>
    %292 = vector.shape_cast %291 : vector<1x8x64xf32> to vector<8x64xf32>
    %cst_210 = arith.constant dense<0.000000e+00> : vector<8x8xf32>
    %293 = tpu.matmul %292, %240, %cst_210 {dimension_numbers = #tpu.dot_dimension_numbers<[1], [0], [0], [1], [0, 0, 1, 1], [], []>} : vector<8x64xf32>, vector<64x8xf32>, vector<8x8xf32> -> vector<8x8xf32>
    %c7_211 = arith.constant 7 : index
    %c0_212 = arith.constant 0 : index
    %c0_213 = arith.constant 0 : index
    %294 = vector.load %arg4[%c7_211, %c0_212, %c0_213] : memref<8x8x64xf32, #tpu.memory_space<vmem>>, vector<1x8x64xf32>
    %295 = vector.shape_cast %294 : vector<1x8x64xf32> to vector<8x64xf32>
    %cst_214 = arith.constant dense<0.000000e+00> : vector<8x64xf32>
    %296 = tpu.matmul %293, %295, %cst_214 {dimension_numbers = #tpu.dot_dimension_numbers<[1], [0], [0], [1], [0, 0, 1, 1], [], []>} : vector<8x8xf32>, vector<8x64xf32>, vector<8x64xf32> -> vector<8x64xf32>
    %297 = arith.addf %290, %296 : vector<8x64xf32>
    %c0_215 = arith.constant 0 : index
    %c0_216 = arith.constant 0 : index
    %298 = vector.load %arg5[%c0_215, %c0_216] : memref<1x64xf32, #tpu.memory_space<vmem>>, vector<1x64xf32>
    %299 = vector.broadcast %298 : vector<1x64xf32> to vector<8x64xf32>
    %300 = arith.addf %297, %299 : vector<8x64xf32>
    %c0_217 = arith.constant 0 : index
    %c0_218 = arith.constant 0 : index
    %301 = vector.load %arg6[%c0_217, %c0_218] : memref<8x64xf32, #tpu.memory_space<vmem>>, vector<8x64xf32>
    tpu.vector_store %arg6[%c0_217, %c0_218], %300 {strides = array<i32>} : memref<8x64xf32, #tpu.memory_space<vmem>>, vector<8x64xf32>,
    return
  }
  func.func @transform_0(%arg0: i32) -> (i32, i32, i32) {
    %c0_i32 = arith.constant 0 : i32
    %c0_i32_0 = arith.constant 0 : i32
    %c0_i32_1 = arith.constant 0 : i32
    %c0_i32_2 = arith.constant 0 : i32
    return %c0_i32, %c0_i32_0, %c0_i32_1 : i32, i32, i32
  }
  func.func @transform_1(%arg0: i32) -> (i32, i32, i32, i32) {
    %c0_i32 = arith.constant 0 : i32
    %c0_i32_0 = arith.constant 0 : i32
    %c0_i32_1 = arith.constant 0 : i32
    %c0_i32_2 = arith.constant 0 : i32
    %c0_i32_3 = arith.constant 0 : i32
    return %c0_i32, %c0_i32_0, %c0_i32_1, %c0_i32_2 : i32, i32, i32, i32
  }
  func.func @transform_2(%arg0: i32) -> (i32, i32, i32) {
    %c0_i32 = arith.constant 0 : i32
    %c0_i32_0 = arith.constant 0 : i32
    %c0_i32_1 = arith.constant 0 : i32
    %c0_i32_2 = arith.constant 0 : i32
    return %c0_i32, %c0_i32_0, %c0_i32_1 : i32, i32, i32
  }
  func.func @transform_3(%arg0: i32) -> (i32, i32, i32) {
    %c0_i32 = arith.constant 0 : i32
    %c0_i32_0 = arith.constant 0 : i32
    %c0_i32_1 = arith.constant 0 : i32
    %c0_i32_2 = arith.constant 0 : i32
    return %c0_i32, %c0_i32_0, %c0_i32_1 : i32, i32, i32
  }
  func.func @transform_4(%arg0: i32) -> (i32, i32) {
    %c0_i32 = arith.constant 0 : i32
    %c0_i32_0 = arith.constant 0 : i32
    %c0_i32_1 = arith.constant 0 : i32
    return %c0_i32, %c0_i32_0 : i32, i32
  }
  func.func @transform_5(%arg0: i32) -> (i32, i32) {
    %c0_i32 = arith.constant 0 : i32
    %c0_i32_0 = arith.constant 0 : i32
    %c0_i32_1 = arith.constant 0 : i32
    return %c0_i32, %c0_i32_0 : i32, i32
  }
}

</mosaic_0001>

<llo_original>
// kernel: tpu_custom_call.1
$region0: #{tpu_custom_call.1}
  #allocation0 [shape = 'u32[]', space=smem, size = 0x4, offset = 0x4, fixed_abs, tag = 'smem constant byte address 0x4 - core index']
  #allocation1 [shape = 'u32[144,128]{1,0:T(1,128)}', space=vmem, size = 0x12000, scoped, tag = 'internal scratch']
  %s0 = inlined_call_operand.vmem [shape: f32[9,8,64], index: 0, kind: input, shape index: {}]
  %s1 = inlined_call_operand.vmem [shape: f32[3,10,8,1], index: 1, kind: input, shape index: {}]
  %s2 = inlined_call_operand.vmem [shape: f32[8,8,64], index: 2, kind: input, shape index: {}]
  %s3 = inlined_call_operand.vmem [shape: f32[8,8,64], index: 3, kind: input, shape index: {}]
  %s4 = inlined_call_operand.vmem [shape: f32[1,64], index: 4, kind: input, shape index: {}]
  %s5 = inlined_call_operand.hbm [shape: f32[8,64], index: 5, kind: output, shape index: {}]
  %s6 = sld [smem:[#allocation0]]
  $region30: #{tpu_custom_call.1} parent=0
    _
  %s8 = ssub.s32 1, %s6
  %s9 = scalar_select 0, %s8, %s6
  $region1: #{tpu_custom_call.1} parent=0
    #allocation2 [shape = 'u8[4096]{0}', space=vmem, size = 0x1000, scoped, tag = 'output window, operand 0, single buffered']
    #allocation3 [shape = 's32[1]{0}', space=sflag, size = 0x4, scoped, tag = 'scoped memory for tpu_custom_call.1']
    %10 = vsyncpa [#allocation3], 0
    // Predicated region
    $region2: #{tpu_custom_call.1} parent=1 // pred_check
      _
    $region3: #{tpu_custom_call.1} parent=1 // pred_check_branch
      %12 = sbr.rel (0) target = $region5
    $region4: #{tpu_custom_call.1} parent=1 // pred_region
      _
    $region5: #{tpu_custom_call.1} parent=1 // pred_fallthru
      _
    // Predicated region
    $region6: #{tpu_custom_call.1} parent=1 // pred_check
      _
    $region7: #{tpu_custom_call.1} parent=1 // pred_check_branch
      %14 = sbr.rel (0) target = $region9
    $region8: #{tpu_custom_call.1} parent=1 // pred_region
      _
    $region9: #{tpu_custom_call.1} parent=1 // pred_fallthru
      _
    // Predicated region
    $region10: #{tpu_custom_call.1} parent=1 // pred_check
      _
    $region11: #{tpu_custom_call.1} parent=1 // pred_check_branch
      %16 = sbr.rel (0) target = $region13
    $region12: #{tpu_custom_call.1} parent=1 // pred_region
      _
    $region13: #{tpu_custom_call.1} parent=1 // pred_fallthru
      _
    // Predicated region
    $region14: #{tpu_custom_call.1} parent=1 // pred_check
      _
    $region15: #{tpu_custom_call.1} parent=1 // pred_check_branch
      %18 = sbr.rel (0) target = $region17
    $region16: #{tpu_custom_call.1} parent=1 // pred_region
      _
    $region17: #{tpu_custom_call.1} parent=1 // pred_fallthru
      _
    // Predicated region
    $region18: #{tpu_custom_call.1} parent=1 // pred_check
      _
    $region19: #{tpu_custom_call.1} parent=1 // pred_check_branch
      %20 = sbr.rel (0) target = $region21
    $region20: #{tpu_custom_call.1} parent=1 // pred_region
      _
    $region21: #{tpu_custom_call.1} parent=1 // pred_fallthru
      _
    %v22 = vld [vmem:[%s0] sm:$0xff]
    %v23 = vld [vmem:[%s1] sm:$0xff]
    %25 = vset.pattern.permute.xlu0 0
    %26 = vperm.xlu0 %25, %v23
    %v27 = vpop.permute.xlu0 %26
    %v29 = vmul.f32 %v22, %v27
    %s30 = scalar_lea.vmem %s1, 80
    %v31 = vld [vmem:[%s30] sm:$0xff]
    %33 = vset.pattern.permute.xlu0 0
    %34 = vperm.xlu0 %33, %v31
    %v35 = vpop.permute.xlu0 %34
    %v37 = vmul.f32 %v22, %v35
    %s38 = scalar_lea.vmem %s1, 160
    %v39 = vld [vmem:[%s38] sm:$0xff]
    %41 = vset.pattern.permute.xlu0 0
    %42 = vperm.xlu0 %41, %v39
    %v43 = vpop.permute.xlu0 %42
    %v45 = vmul.f32 %v22, %v43
    %s46 = scalar_lea.vmem %s0, 8
    %v47 = vld [vmem:[%s46] sm:$0xff]
    %s48 = scalar_lea.vmem %s1, 8
    %v49 = vld [vmem:[%s48] sm:$0xff]
    %51 = vset.pattern.permute.xlu0 0
    %52 = vperm.xlu0 %51, %v49
    %v53 = vpop.permute.xlu0 %52
    %v55 = vmul.f32 %v47, %v53
    %v56 = vadd.f32 %v29, %v55
    %s57 = scalar_lea.vmem %s1, 88
    %v58 = vld [vmem:[%s57] sm:$0xff]
    %60 = vset.pattern.permute.xlu0 0
    %61 = vperm.xlu0 %60, %v58
    %v62 = vpop.permute.xlu0 %61
    %v64 = vmul.f32 %v47, %v62
    %v65 = vadd.f32 %v37, %v64
    %s66 = scalar_lea.vmem %s1, 168
    %v67 = vld [vmem:[%s66] sm:$0xff]
    %69 = vset.pattern.permute.xlu0 0
    %70 = vperm.xlu0 %69, %v67
    %v71 = vpop.permute.xlu0 %70
    %v73 = vmul.f32 %v47, %v71
    %v74 = vadd.f32 %v45, %v73
    %s75 = scalar_lea.vmem %s0, 16
    %v76 = vld [vmem:[%s75] sm:$0xff]
    %s77 = scalar_lea.vmem %s1, 16
    %v78 = vld [vmem:[%s77] sm:$0xff]
    %80 = vset.pattern.permute.xlu0 0
    %81 = vperm.xlu0 %80, %v78
    %v82 = vpop.permute.xlu0 %81
    %v84 = vmul.f32 %v76, %v82
    %v85 = vadd.f32 %v56, %v84
    %s86 = scalar_lea.vmem %s1, 96
    %v87 = vld [vmem:[%s86] sm:$0xff]
    %89 = vset.pattern.permute.xlu0 0
    %90 = vperm.xlu0 %89, %v87
    %v91 = vpop.permute.xlu0 %90
    %v93 = vmul.f32 %v76, %v91
    %v94 = vadd.f32 %v65, %v93
    %s95 = scalar_lea.vmem %s1, 176
    %v96 = vld [vmem:[%s95] sm:$0xff]
    %98 = vset.pattern.permute.xlu0 0
    %99 = vperm.xlu0 %98, %v96
    %v100 = vpop.permute.xlu0 %99
    %v102 = vmul.f32 %v76, %v100
    %v103 = vadd.f32 %v74, %v102
    %s104 = scalar_lea.vmem %s0, 24
    %v105 = vld [vmem:[%s104] sm:$0xff]
    %s106 = scalar_lea.vmem %s1, 24
    %v107 = vld [vmem:[%s106] sm:$0xff]
    %109 = vset.pattern.permute.xlu0 0
    %110 = vperm.xlu0 %109, %v107
    %v111 = vpop.permute.xlu0 %110
    %v113 = vmul.f32 %v105, %v111
    %v114 = vadd.f32 %v85, %v113
    %s115 = scalar_lea.vmem %s1, 104
    %v116 = vld [vmem:[%s115] sm:$0xff]
    %118 = vset.pattern.permute.xlu0 0
    %119 = vperm.xlu0 %118, %v116
    %v120 = vpop.permute.xlu0 %119
    %v122 = vmul.f32 %v105, %v120
    %v123 = vadd.f32 %v94, %v122
    %s124 = scalar_lea.vmem %s1, 184
    %v125 = vld [vmem:[%s124] sm:$0xff]
    %127 = vset.pattern.permute.xlu0 0
    %128 = vperm.xlu0 %127, %v125
    %v129 = vpop.permute.xlu0 %128
    %v131 = vmul.f32 %v105, %v129
    %v132 = vadd.f32 %v103, %v131
    %s133 = scalar_lea.vmem %s0, 32
    %v134 = vld [vmem:[%s133] sm:$0xff]
    %s135 = scalar_lea.vmem %s1, 32
    %v136 = vld [vmem:[%s135] sm:$0xff]
    %138 = vset.pattern.permute.xlu0 0
    %139 = vperm.xlu0 %138, %v136
    %v140 = vpop.permute.xlu0 %139
    %v142 = vmul.f32 %v134, %v140
    %v143 = vadd.f32 %v114, %v142
    %s144 = scalar_lea.vmem %s1, 112
    %v145 = vld [vmem:[%s144] sm:$0xff]
    %147 = vset.pattern.permute.xlu0 0
    %148 = vperm.xlu0 %147, %v145
    %v149 = vpop.permute.xlu0 %148
    %v151 = vmul.f32 %v134, %v149
    %v152 = vadd.f32 %v123, %v151
    %s153 = scalar_lea.vmem %s1, 192
    %v154 = vld [vmem:[%s153] sm:$0xff]
    %156 = vset.pattern.permute.xlu0 0
    %157 = vperm.xlu0 %156, %v154
    %v158 = vpop.permute.xlu0 %157
    %v160 = vmul.f32 %v134, %v158
    %v161 = vadd.f32 %v132, %v160
    %s162 = scalar_lea.vmem %s0, 40
    %v163 = vld [vmem:[%s162] sm:$0xff]
    %s164 = scalar_lea.vmem %s1, 40
    %v165 = vld [vmem:[%s164] sm:$0xff]
    %167 = vset.pattern.permute.xlu0 0
    %168 = vperm.xlu0 %167, %v165
    %v169 = vpop.permute.xlu0 %168
    %v171 = vmul.f32 %v163, %v169
    %v172 = vadd.f32 %v143, %v171
    %s173 = scalar_lea.vmem %s1, 120
    %v174 = vld [vmem:[%s173] sm:$0xff]
    %176 = vset.pattern.permute.xlu0 0
    %177 = vperm.xlu0 %176, %v174
    %v178 = vpop.permute.xlu0 %177
    %v180 = vmul.f32 %v163, %v178
    %v181 = vadd.f32 %v152, %v180
    %s182 = scalar_lea.vmem %s1, 200
    %v183 = vld [vmem:[%s182] sm:$0xff]
    %185 = vset.pattern.permute.xlu0 0
    %186 = vperm.xlu0 %185, %v183
    %v187 = vpop.permute.xlu0 %186
    %v189 = vmul.f32 %v163, %v187
    %v190 = vadd.f32 %v161, %v189
    %s191 = scalar_lea.vmem %s0, 48
    %v192 = vld [vmem:[%s191] sm:$0xff]
    %s193 = scalar_lea.vmem %s1, 48
    %v194 = vld [vmem:[%s193] sm:$0xff]
    %196 = vset.pattern.permute.xlu0 0
    %197 = vperm.xlu0 %196, %v194
    %v198 = vpop.permute.xlu0 %197
    %v200 = vmul.f32 %v192, %v198
    %v201 = vadd.f32 %v172, %v200
    %s202 = scalar_lea.vmem %s1, 128
    %v203 = vld [vmem:[%s202] sm:$0xff]
    %205 = vset.pattern.permute.xlu0 0
    %206 = vperm.xlu0 %205, %v203
    %v207 = vpop.permute.xlu0 %206
    %v209 = vmul.f32 %v192, %v207
    %v210 = vadd.f32 %v181, %v209
    %s211 = scalar_lea.vmem %s1, 208
    %v212 = vld [vmem:[%s211] sm:$0xff]
    %214 = vset.pattern.permute.xlu0 0
    %215 = vperm.xlu0 %214, %v212
    %v216 = vpop.permute.xlu0 %215
    %v218 = vmul.f32 %v192, %v216
    %v219 = vadd.f32 %v190, %v218
    %s220 = scalar_lea.vmem %s0, 56
    %v221 = vld [vmem:[%s220] sm:$0xff]
    %s222 = scalar_lea.vmem %s1, 56
    %v223 = vld [vmem:[%s222] sm:$0xff]
    %225 = vset.pattern.permute.xlu0 0
    %226 = vperm.xlu0 %225, %v223
    %v227 = vpop.permute.xlu0 %226
    %v229 = vmul.f32 %v221, %v227
    %v230 = vadd.f32 %v201, %v229
    %s231 = scalar_lea.vmem %s1, 136
    %v232 = vld [vmem:[%s231] sm:$0xff]
    %234 = vset.pattern.permute.xlu0 0
    %235 = vperm.xlu0 %234, %v232
    %v236 = vpop.permute.xlu0 %235
    %v238 = vmul.f32 %v221, %v236
    %v239 = vadd.f32 %v210, %v238
    %s240 = scalar_lea.vmem %s1, 216
    %v241 = vld [vmem:[%s240] sm:$0xff]
    %243 = vset.pattern.permute.xlu0 0
    %244 = vperm.xlu0 %243, %v241
    %v245 = vpop.permute.xlu0 %244
    %v247 = vmul.f32 %v221, %v245
    %v248 = vadd.f32 %v219, %v247
    %s249 = scalar_lea.vmem %s0, 64
    %v250 = vld [vmem:[%s249] sm:$0xff]
    %s251 = scalar_lea.vmem %s1, 64
    %v252 = vld [vmem:[%s251] sm:$0xff]
    %254 = vset.pattern.permute.xlu0 0
    %255 = vperm.xlu0 %254, %v252
    %v256 = vpop.permute.xlu0 %255
    %v258 = vmul.f32 %v250, %v256
    %v259 = vadd.f32 %v230, %v258
    %s260 = scalar_lea.vmem %s1, 144
    %v261 = vld [vmem:[%s260] sm:$0xff]
    %263 = vset.pattern.permute.xlu0 0
    %264 = vperm.xlu0 %263, %v261
    %v265 = vpop.permute.xlu0 %264
    %v267 = vmul.f32 %v250, %v265
    %v268 = vadd.f32 %v239, %v267
    %s269 = scalar_lea.vmem %s1, 224
    %v270 = vld [vmem:[%s269] sm:$0xff]
    %272 = vset.pattern.permute.xlu0 0
    %273 = vperm.xlu0 %272, %v270
    %v274 = vpop.permute.xlu0 %273
    %v276 = vmul.f32 %v250, %v274
    %v277 = vadd.f32 %v248, %v276
    %s278 = scalar_lea.vmem %s1, 72
    %v279 = vld [vmem:[%s278] sm:$0xff]
    %281 = vset.pattern.permute.xlu0 0
    %282 = vperm.xlu0 %281, %v279
    %v283 = vpop.permute.xlu0 %282
    %v285 = vadd.f32 %v259, %v283
    %s286 = scalar_lea.vmem %s1, 152
    %v287 = vld [vmem:[%s286] sm:$0xff]
    %289 = vset.pattern.permute.xlu0 0
    %290 = vperm.xlu0 %289, %v287
    %v291 = vpop.permute.xlu0 %290
    %v293 = vadd.f32 %v268, %v291
    %s294 = scalar_lea.vmem %s1, 232
    %v295 = vld [vmem:[%s294] sm:$0xff]
    %297 = vset.pattern.permute.xlu0 0
    %298 = vperm.xlu0 %297, %v295
    %v299 = vpop.permute.xlu0 %298
    %v301 = vadd.f32 %v277, %v299
    %303 = vrot.lane.b32.xlu0 %v285, 120
    %v304 = vpop.permute.xlu0 %303
    %306 = vrot.lane.b32.xlu0 %v285, 112
    %v307 = vpop.permute.xlu0 %306
    %309 = vrot.lane.b32.xlu0 %v285, 104
    %v310 = vpop.permute.xlu0 %309
    %312 = vrot.lane.b32.xlu0 %v285, 96
    %v313 = vpop.permute.xlu0 %312
    %315 = vrot.lane.b32.xlu0 %v285, 88
    %v316 = vpop.permute.xlu0 %315
    %318 = vrot.lane.b32.xlu0 %v285, 80
    %v319 = vpop.permute.xlu0 %318
    %321 = vrot.lane.b32.xlu0 %v285, 72
    %v322 = vpop.permute.xlu0 %321
    %325 = vrot.lane.b32.xlu0 %v293, 120
    %v326 = vpop.permute.xlu0 %325
    %328 = vrot.lane.b32.xlu0 %v293, 112
    %v329 = vpop.permute.xlu0 %328
    %331 = vrot.lane.b32.xlu0 %v293, 104
    %v332 = vpop.permute.xlu0 %331
    %334 = vrot.lane.b32.xlu0 %v293, 96
    %v335 = vpop.permute.xlu0 %334
    %337 = vrot.lane.b32.xlu0 %v293, 88
    %v338 = vpop.permute.xlu0 %337
    %340 = vrot.lane.b32.xlu0 %v293, 80
    %v341 = vpop.permute.xlu0 %340
    %343 = vrot.lane.b32.xlu0 %v293, 72
    %v344 = vpop.permute.xlu0 %343
    %347 = vrot.lane.b32.xlu0 %v301, 120
    %v348 = vpop.permute.xlu0 %347
    %350 = vrot.lane.b32.xlu0 %v301, 112
    %v351 = vpop.permute.xlu0 %350
    %353 = vrot.lane.b32.xlu0 %v301, 104
    %v354 = vpop.permute.xlu0 %353
    %356 = vrot.lane.b32.xlu0 %v301, 96
    %v357 = vpop.permute.xlu0 %356
    %359 = vrot.lane.b32.xlu0 %v301, 88
    %v360 = vpop.permute.xlu0 %359
    %362 = vrot.lane.b32.xlu0 %v301, 80
    %v363 = vpop.permute.xlu0 %362
    %365 = vrot.lane.b32.xlu0 %v301, 72
    %v366 = vpop.permute.xlu0 %365
    %v368 = vpack.c.bf16 %v304, %v285
    %v369 = vpack.c.bf16 %v310, %v307
    %v370 = vpack.c.bf16 %v316, %v313
    %v371 = vpack.c.bf16 %v322, %v319
    %v372 = vpack.c.bf16 %v326, %v293
    %v373 = vpack.c.bf16 %v332, %v329
    %v374 = vpack.c.bf16 %v338, %v335
    %v375 = vpack.c.bf16 %v344, %v341
    %vm376 = vcmask 64512
    %v378 = vsel %vm376, %v368, 0
    %v381 = vsel %vm376, %v369, 0
    %v384 = vsel %vm376, %v370, 0
    %v387 = vsel %vm376, %v371, 0
    %v390 = vsel %vm376, %v372, 0
    %v393 = vsel %vm376, %v373, 0
    %v396 = vsel %vm376, %v374, 0
    %v399 = vsel %vm376, %v375, 0
    %401 = vmatprep.subr.bf16.mxu0 0
    %402 = vmatpush1.bf16.xpose.msra.mxu0 0
    %403 = vmatprep.subr.bf16.mxu0 0
    %404 = vmatpush1.bf16.xpose.msra.mxu0 0
    %405 = vmatprep.subr.bf16.mxu0 0
    %406 = vmatpush1.bf16.xpose.msra.mxu0 0
    %407 = vmatprep.subr.bf16.mxu0 0
    %408 = vmatpush1.bf16.xpose.msra.mxu0 0
    %409 = vmatprep.subr.bf16.mxu0 0
    %410 = vmatpush1.bf16.xpose.msra.mxu0 %v399
    %411 = vmatprep.subr.bf16.mxu0 0
    %412 = vmatpush1.bf16.xpose.msra.mxu0 %v396
    %413 = vmatprep.subr.bf16.mxu0 0
    %414 = vmatpush1.bf16.xpose.msra.mxu0 %v393
    %415 = vmatprep.subr.bf16.mxu0 0
    %416 = vmatpush1.bf16.xpose.msra.mxu0 %v390
    %417 = vmatprep.subr.bf16.mxu0 0
    %418 = vmatpush2.bf16.xpose.msra.mxu0 0
    %419 = vmatprep.subr.bf16.mxu0 0
    %420 = vmatpush2.bf16.xpose.msra.mxu0 0
    %421 = vmatprep.subr.bf16.mxu0 0
    %422 = vmatpush2.bf16.xpose.msra.mxu0 0
    %423 = vmatprep.subr.bf16.mxu0 0
    %424 = vmatpush2.bf16.xpose.msra.mxu0 0
    %425 = vmatprep.subr.bf16.mxu0 0
    %426 = vmatpush2.bf16.xpose.msra.mxu0 0
    %427 = vmatprep.subr.bf16.mxu0 0
    %428 = vmatpush2.bf16.xpose.msra.mxu0 0
    %429 = vmatprep.subr.bf16.mxu0 0
    %430 = vmatpush2.bf16.xpose.msra.mxu0 0
    %431 = vmatprep.subr.bf16.mxu0 0
    %432 = vmatpush2.bf16.xpose.msra.mxu0 0
    %433 = vmatprep.mubr.bf16.mxu0 0
    %434 = vmatmul.mubr.bf16.gmra.mxu0 %v378
    %v435 = vpop.f32.mrf.mxu0
    %v436 = vadd.f32 0.0, %v435
    %v437 = vpop.f32.mrf.mxu0
    %v438 = vpop.f32.mrf.mxu0
    %v439 = vadd.f32 0.0, %v438
    %v440 = vpop.f32.mrf.mxu0
    %441 = vmatprep.mubr.bf16.mxu0 0
    %442 = vmatmul.mubr.bf16.gmra.mxu0 %v381
    %v443 = vpop.f32.mrf.mxu0
    %v444 = vadd.f32 0.0, %v443
    %v445 = vpop.f32.mrf.mxu0
    %v446 = vpop.f32.mrf.mxu0
    %v447 = vadd.f32 0.0, %v446
    %v448 = vpop.f32.mrf.mxu0
    %449 = vmatprep.mubr.bf16.mxu0 0
    %450 = vmatmul.mubr.bf16.gmra.mxu0 %v384
    %v451 = vpop.f32.mrf.mxu0
    %v452 = vadd.f32 0.0, %v451
    %v453 = vpop.f32.mrf.mxu0
    %v454 = vpop.f32.mrf.mxu0
    %v455 = vadd.f32 0.0, %v454
    %v456 = vpop.f32.mrf.mxu0
    %457 = vmatprep.mubr.bf16.mxu0 0
    %458 = vmatmul.mubr.bf16.gmra.mxu0 %v387
    %v459 = vpop.f32.mrf.mxu0
    %v460 = vadd.f32 0.0, %v459
    %v461 = vpop.f32.mrf.mxu0
    %v462 = vpop.f32.mrf.mxu0
    %v463 = vadd.f32 0.0, %v462
    %v464 = vpop.f32.mrf.mxu0
    %465 = vdwg.mxu0
    %v466 = vlaneseq
    %v467 = vshrl.u32 %v466, 7
    %v468 = vadd.s32 %v467, 8
    %v469 = vadd.s32 %v467, 16
    %v470 = vadd.s32 %v467, 24
    %v471 = vadd.s32 %v467, 32
    %v472 = vadd.s32 %v467, 40
    %v473 = vadd.s32 %v467, 48
    %v474 = vadd.s32 %v467, 56
    %v475 = vlaneseq
    %v476 = vand.u32 %v475, 127
    %vm477 = vcmp.lt.s32.totalorder %v467, 0
    %v478 = vsub.s32 0, %v467
    %v479 = vsel %vm477, %v478, %v467
    %v480 = vshrl.u32 %v479, 3
    %v481 = vand.u32 %v479, 7
    %v482 = vsub.s32 0, %v481
    %v483 = vsel %vm477, %v482, %v481
    %vm484 = vcmp.lt.s32.totalorder %v468, 0
    %v485 = vsub.s32 0, %v468
    %v486 = vsel %vm484, %v485, %v468
    %v487 = vshrl.u32 %v486, 3
    %v488 = vand.u32 %v486, 7
    %v489 = vsub.s32 0, %v488
    %v490 = vsel %vm484, %v489, %v488
    %vm491 = vcmp.lt.s32.totalorder %v469, 0
    %v492 = vsub.s32 0, %v469
    %v493 = vsel %vm491, %v492, %v469
    %v494 = vshrl.u32 %v493, 3
    %v495 = vand.u32 %v493, 7
    %v496 = vsub.s32 0, %v495
    %v497 = vsel %vm491, %v496, %v495
    %vm498 = vcmp.lt.s32.totalorder %v470, 0
    %v499 = vsub.s32 0, %v470
    %v500 = vsel %vm498, %v499, %v470
    %v501 = vshrl.u32 %v500, 3
    %v502 = vand.u32 %v500, 7
    %v503 = vsub.s32 0, %v502
    %v504 = vsel %vm498, %v503, %v502
    %vm505 = vcmp.lt.s32.totalorder %v471, 0
    %v506 = vsub.s32 0, %v471
    %v507 = vsel %vm505, %v506, %v471
    %v508 = vshrl.u32 %v507, 3
    %v509 = vand.u32 %v507, 7
    %v510 = vsub.s32 0, %v509
    %v511 = vsel %vm505, %v510, %v509
    %vm512 = vcmp.lt.s32.totalorder %v472, 0
    %v513 = vsub.s32 0, %v472
    %v514 = vsel %vm512, %v513, %v472
    %v515 = vshrl.u32 %v514, 3
    %v516 = vand.u32 %v514, 7
    %v517 = vsub.s32 0, %v516
    %v518 = vsel %vm512, %v517, %v516
    %vm519 = vcmp.lt.s32.totalorder %v473, 0
    %v520 = vsub.s32 0, %v473
    %v521 = vsel %vm519, %v520, %v473
    %v522 = vshrl.u32 %v521, 3
    %v523 = vand.u32 %v521, 7
    %v524 = vsub.s32 0, %v523
    %v525 = vsel %vm519, %v524, %v523
    %vm526 = vcmp.lt.s32.totalorder %v474, 0
    %v527 = vsub.s32 0, %v474
    %v528 = vsel %vm526, %v527, %v474
    %v529 = vshrl.u32 %v528, 3
    %v530 = vand.u32 %v528, 7
    %v531 = vsub.s32 0, %v530
    %v532 = vsel %vm526, %v531, %v530
    %vm533 = vcmp.ne.s32.totalorder %v483, 0
    %vm534 = vcmp.ne.s32.totalorder %v490, 0
    %vm535 = vcmp.ne.s32.totalorder %v497, 0
    %vm536 = vcmp.ne.s32.totalorder %v504, 0
    %vm537 = vcmp.ne.s32.totalorder %v511, 0
    %vm538 = vcmp.ne.s32.totalorder %v518, 0
    %vm539 = vcmp.ne.s32.totalorder %v525, 0
    %vm540 = vcmp.ne.s32.totalorder %v532, 0
    %vm541 = vcmp.lt.s32.totalorder %v483, 0
    %vm542 = vcmp.lt.s32.totalorder %v490, 0
    %vm543 = vcmp.lt.s32.totalorder %v497, 0
    %vm544 = vcmp.lt.s32.totalorder %v504, 0
    %vm545 = vcmp.lt.s32.totalorder %v511, 0
    %vm546 = vcmp.lt.s32.totalorder %v518, 0
    %vm547 = vcmp.lt.s32.totalorder %v525, 0
    %vm548 = vcmp.lt.s32.totalorder %v532, 0
    %vm549 = vmand %vm541, %vm533
    %vm550 = vmand %vm542, %vm534
    %vm551 = vmand %vm543, %vm535
    %vm552 = vmand %vm544, %vm536
    %vm553 = vmand %vm545, %vm537
    %vm554 = vmand %vm546, %vm538
    %vm555 = vmand %vm547, %vm539
    %vm556 = vmand %vm548, %vm540
    %v557 = vadd.s32 %v483, 8
    %v558 = vadd.s32 %v490, 8
    %v559 = vadd.s32 %v497, 8
    %v560 = vadd.s32 %v504, 8
    %v561 = vadd.s32 %v511, 8
    %v562 = vadd.s32 %v518, 8
    %v563 = vadd.s32 %v525, 8
    %v564 = vadd.s32 %v532, 8
    %v565 = vsel %vm549, %v557, %v483
    %v566 = vsel %vm550, %v558, %v490
    %v567 = vsel %vm551, %v559, %v497
    %v568 = vsel %vm552, %v560, %v504
    %v569 = vsel %vm553, %v561, %v511
    %v570 = vsel %vm554, %v562, %v518
    %v571 = vsel %vm555, %v563, %v525
    %v572 = vsel %vm556, %v564, %v532
    %vm573 = vcmp.lt.s32.totalorder %v476, 0
    %v574 = vsub.s32 0, %v476
    %v575 = vsel %vm573, %v574, %v476
    %v576 = vshrl.u32 %v575, 3
    %v577 = vand.u32 %v575, 7
    %v578 = vsub.s32 0, %v577
    %v579 = vsel %vm573, %v578, %v577
    %vm580 = vcmp.ne.s32.totalorder %v579, 0
    %vm581 = vcmp.lt.s32.totalorder %v579, 0
    %vm582 = vmand %vm581, %vm580
    %v583 = vadd.s32 %v579, 8
    %v584 = vsel %vm582, %v583, %v579
    %vm585 = vcmp.eq.s32.totalorder %v565, %v584
    %vm586 = vcmp.eq.s32.totalorder %v566, %v584
    %vm587 = vcmp.eq.s32.totalorder %v567, %v584
    %vm588 = vcmp.eq.s32.totalorder %v568, %v584
    %vm589 = vcmp.eq.s32.totalorder %v569, %v584
    %vm590 = vcmp.eq.s32.totalorder %v570, %v584
    %vm591 = vcmp.eq.s32.totalorder %v571, %v584
    %vm592 = vcmp.eq.s32.totalorder %v572, %v584
    %v593 = vsel %vm585, %v436, -1e+30
    %v594 = vsel %vm586, %v439, -1e+30
    %v595 = vsel %vm587, %v444, -1e+30
    %v596 = vsel %vm588, %v447, -1e+30
    %v597 = vsel %vm589, %v452, -1e+30
    %v598 = vsel %vm590, %v455, -1e+30
    %v599 = vsel %vm591, %v460, -1e+30
    %v600 = vsel %vm592, %v463, -1e+30
    %vm601 = vcmask 523264
    %v602 = vsel %vm601, %v593, -inf
    %603 = vmax.xlane.f32.xlu0 %v602
    %v604 = vpop.xlane.xlu0 %603
    %v605 = vsel %vm601, %v594, -inf
    %606 = vmax.xlane.f32.xlu0 %v605
    %v607 = vpop.xlane.xlu0 %606
    %v608 = vsel %vm601, %v595, -inf
    %609 = vmax.xlane.f32.xlu0 %v608
    %v610 = vpop.xlane.xlu0 %609
    %v611 = vsel %vm601, %v596, -inf
    %612 = vmax.xlane.f32.xlu0 %v611
    %v613 = vpop.xlane.xlu0 %612
    %v614 = vsel %vm601, %v597, -inf
    %615 = vmax.xlane.f32.xlu0 %v614
    %v616 = vpop.xlane.xlu0 %615
    %v617 = vsel %vm601, %v598, -inf
    %618 = vmax.xlane.f32.xlu0 %v617
    %v619 = vpop.xlane.xlu0 %618
    %v620 = vsel %vm601, %v599, -inf
    %621 = vmax.xlane.f32.xlu0 %v620
    %v622 = vpop.xlane.xlu0 %621
    %v623 = vsel %vm601, %v600, -inf
    %624 = vmax.xlane.f32.xlu0 %v623
    %v625 = vpop.xlane.xlu0 %624
    %v626 = vsub.f32 %v593, %v604
    %v627 = vsub.f32 %v594, %v607
    %v628 = vsub.f32 %v595, %v610
    %v629 = vsub.f32 %v596, %v613
    %v630 = vsub.f32 %v597, %v616
    %v631 = vsub.f32 %v598, %v619
    %v632 = vsub.f32 %v599, %v622
    %v633 = vsub.f32 %v600, %v625
    %v634 = vmul.f32 %v626, 1.442695
    %v635 = vpow.pop %v634
    %v636 = vmul.f32 %v627, 1.442695
    %v637 = vpow.pop %v636
    %v638 = vmul.f32 %v628, 1.442695
    %v639 = vpow.pop %v638
    %v640 = vmul.f32 %v629, 1.442695
    %v641 = vpow.pop %v640
    %v642 = vmul.f32 %v630, 1.442695
    %v643 = vpow.pop %v642
    %v644 = vmul.f32 %v631, 1.442695
    %v645 = vpow.pop %v644
    %v646 = vmul.f32 %v632, 1.442695
    %v647 = vpow.pop %v646
    %v648 = vmul.f32 %v633, 1.442695
    %v649 = vpow.pop %v648
    %v650 = vsel %vm601, %v635, 0.0
    %651 = vadd.xlane.f32.xlu0 %v650
    %v652 = vpop.xlane.xlu0 %651
    %v653 = vsel %vm601, %v637, 0.0
    %654 = vadd.xlane.f32.xlu0 %v653
    %v655 = vpop.xlane.xlu0 %654
    %v656 = vsel %vm601, %v639, 0.0
    %657 = vadd.xlane.f32.xlu0 %v656
    %v658 = vpop.xlane.xlu0 %657
    %v659 = vsel %vm601, %v641, 0.0
    %660 = vadd.xlane.f32.xlu0 %v659
    %v661 = vpop.xlane.xlu0 %660
    %v662 = vsel %vm601, %v643, 0.0
    %663 = vadd.xlane.f32.xlu0 %v662
    %v664 = vpop.xlane.xlu0 %663
    %v665 = vsel %vm601, %v645, 0.0
    %666 = vadd.xlane.f32.xlu0 %v665
    %v667 = vpop.xlane.xlu0 %666
    %v668 = vsel %vm601, %v647, 0.0
    %669 = vadd.xlane.f32.xlu0 %v668
    %v670 = vpop.xlane.xlu0 %669
    %v671 = vsel %vm601, %v649, 0.0
    %672 = vadd.xlane.f32.xlu0 %v671
    %v673 = vpop.xlane.xlu0 %672
    %v674 = vrcp.pop %v652
    %v675 = vmul.f32 %v635, %v674
    %v676 = vrcp.pop %v655
    %v677 = vmul.f32 %v637, %v676
    %v678 = vrcp.pop %v658
    %v679 = vmul.f32 %v639, %v678
    %v680 = vrcp.pop %v661
    %v681 = vmul.f32 %v641, %v680
    %v682 = vrcp.pop %v664
    %v683 = vmul.f32 %v643, %v682
    %v684 = vrcp.pop %v667
    %v685 = vmul.f32 %v645, %v684
    %v686 = vrcp.pop %v670
    %v687 = vmul.f32 %v647, %v686
    %v688 = vrcp.pop %v673
    %v689 = vmul.f32 %v649, %v688
    %v690 = vpack.c.bf16 %v677, %v675
    %v691 = vpack.c.bf16 %v681, %v679
    %v692 = vpack.c.bf16 %v685, %v683
    %v693 = vpack.c.bf16 %v689, %v687
    %v694 = vpack.c.bf16 %v348, %v301
    %v695 = vpack.c.bf16 %v354, %v351
    %v696 = vpack.c.bf16 %v360, %v357
    %v697 = vpack.c.bf16 %v366, %v363
    %v699 = vsel %vm601, %v690, 0
    %v702 = vsel %vm601, %v691, 0
    %v705 = vsel %vm601, %v692, 0
    %v708 = vsel %vm601, %v693, 0
    %710 = vmatprep.subr.bf16.mxu0 0
    %711 = vmatpush1.bf16.msra.mxu0 0
    %712 = vmatprep.subr.bf16.mxu0 0
    %713 = vmatpush1.bf16.msra.mxu0 0
    %714 = vmatprep.subr.bf16.mxu0 0
    %715 = vmatpush1.bf16.msra.mxu0 0
    %716 = vmatprep.subr.bf16.mxu0 0
    %717 = vmatpush1.bf16.msra.mxu0 0
    %718 = vmatprep.subr.bf16.mxu0 0
    %719 = vmatpush1.bf16.msra.mxu0 %v697
    %720 = vmatprep.subr.bf16.mxu0 0
    %721 = vmatpush1.bf16.msra.mxu0 %v696
    %722 = vmatprep.subr.bf16.mxu0 0
    %723 = vmatpush1.bf16.msra.mxu0 %v695
    %724 = vmatprep.subr.bf16.mxu0 0
    %725 = vmatpush1.bf16.msra.mxu0 %v694
    %726 = vmatprep.subr.bf16.mxu0 0
    %727 = vmatpush2.bf16.msra.mxu0 0
    %728 = vmatprep.subr.bf16.mxu0 0
    %729 = vmatpush2.bf16.msra.mxu0 0
    %730 = vmatprep.subr.bf16.mxu0 0
    %731 = vmatpush2.bf16.msra.mxu0 0
    %732 = vmatprep.subr.bf16.mxu0 0
    %733 = vmatpush2.bf16.msra.mxu0 0
    %734 = vmatprep.subr.bf16.mxu0 0
    %735 = vmatpush2.bf16.msra.mxu0 0
    %736 = vmatprep.subr.bf16.mxu0 0
    %737 = vmatpush2.bf16.msra.mxu0 0
    %738 = vmatprep.subr.bf16.mxu0 0
    %739 = vmatpush2.bf16.msra.mxu0 0
    %740 = vmatprep.subr.bf16.mxu0 0
    %741 = vmatpush2.bf16.msra.mxu0 0
    %742 = vmatprep.mubr.bf16.mxu0 0
    %743 = vmatmul.mubr.bf16.gmra.mxu0 %v699
    %v744 = vpop.f32.mrf.mxu0
    %v745 = vadd.f32 0.0, %v744
    %v746 = vpop.f32.mrf.mxu0
    %v747 = vpop.f32.mrf.mxu0
    %v748 = vadd.f32 0.0, %v747
    %v749 = vpop.f32.mrf.mxu0
    %750 = vmatprep.mubr.bf16.mxu0 0
    %751 = vmatmul.mubr.bf16.gmra.mxu0 %v702
    %v752 = vpop.f32.mrf.mxu0
    %v753 = vadd.f32 0.0, %v752
    %v754 = vpop.f32.mrf.mxu0
    %v755 = vpop.f32.mrf.mxu0
    %v756 = vadd.f32 0.0, %v755
    %v757 = vpop.f32.mrf.mxu0
    %758 = vmatprep.mubr.bf16.mxu0 0
    %759 = vmatmul.mubr.bf16.gmra.mxu0 %v705
    %v760 = vpop.f32.mrf.mxu0
    %v761 = vadd.f32 0.0, %v760
    %v762 = vpop.f32.mrf.mxu0
    %v763 = vpop.f32.mrf.mxu0
    %v764 = vadd.f32 0.0, %v763
    %v765 = vpop.f32.mrf.mxu0
    %766 = vmatprep.mubr.bf16.mxu0 0
    %767 = vmatmul.mubr.bf16.gmra.mxu0 %v708
    %v768 = vpop.f32.mrf.mxu0
    %v769 = vadd.f32 0.0, %v768
    %v770 = vpop.f32.mrf.mxu0
    %v771 = vpop.f32.mrf.mxu0
    %v772 = vadd.f32 0.0, %v771
    %v773 = vpop.f32.mrf.mxu0
    %774 = vdwg.mxu0
    %v775 = vld [vmem:[%s2] sm:$0xff]
    %v777 = vsel %vm601, %v775, 0
    %779 = vmatprep.subr.mxu0 0.0
    %780 = vmatpush1.msra.mxu0 0.0
    %781 = vmatprep.subr.mxu0 0.0
    %782 = vmatpush1.msra.mxu0 0.0
    %783 = vmatprep.subr.mxu0 0.0
    %784 = vmatpush1.msra.mxu0 0.0
    %785 = vmatprep.subr.mxu0 0.0
    %786 = vmatpush1.msra.mxu0 0.0
    %787 = vmatprep.subr.mxu0 0.0
    %788 = vmatpush1.msra.mxu0 0.0
    %789 = vmatprep.subr.mxu0 0.0
    %790 = vmatpush1.msra.mxu0 0.0
    %791 = vmatprep.subr.mxu0 0.0
    %792 = vmatpush1.msra.mxu0 0.0
    %793 = vmatprep.subr.mxu0 0.0
    %794 = vmatpush1.msra.mxu0 0.0
    %795 = vmatprep.subr.mxu0 0.0
    %796 = vmatpush1.msra.mxu0 %v772
    %797 = vmatprep.subr.mxu0 0.0
    %798 = vmatpush1.msra.mxu0 %v769
    %799 = vmatprep.subr.mxu0 0.0
    %800 = vmatpush1.msra.mxu0 %v764
    %801 = vmatprep.subr.mxu0 0.0
    %802 = vmatpush1.msra.mxu0 %v761
    %803 = vmatprep.subr.mxu0 0.0
    %804 = vmatpush1.msra.mxu0 %v756
    %805 = vmatprep.subr.mxu0 0.0
    %806 = vmatpush1.msra.mxu0 %v753
    %807 = vmatprep.subr.mxu0 0.0
    %808 = vmatpush1.msra.mxu0 %v748
    %809 = vmatprep.subr.mxu0 0.0
    %810 = vmatpush1.msra.mxu0 %v745
    %811 = vmatprep.subr.mxu0 0.0
    %812 = vmatpush2.msra.mxu0 0.0
    %813 = vmatprep.subr.mxu0 0.0
    %814 = vmatpush2.msra.mxu0 0.0
    %815 = vmatprep.subr.mxu0 0.0
    %816 = vmatpush2.msra.mxu0 0.0
    %817 = vmatprep.subr.mxu0 0.0
    %818 = vmatpush2.msra.mxu0 0.0
    %819 = vmatprep.subr.mxu0 0.0
    %820 = vmatpush2.msra.mxu0 0.0
    %821 = vmatprep.subr.mxu0 0.0
    %822 = vmatpush2.msra.mxu0 0.0
    %823 = vmatprep.subr.mxu0 0.0
    %824 = vmatpush2.msra.mxu0 0.0
    %825 = vmatprep.subr.mxu0 0.0
    %826 = vmatpush2.msra.mxu0 0.0
    %827 = vmatprep.subr.mxu0 0.0
    %828 = vmatpush2.msra.mxu0 0.0
    %829 = vmatprep.subr.mxu0 0.0
    %830 = vmatpush2.msra.mxu0 0.0
    %831 = vmatprep.subr.mxu0 0.0
    %832 = vmatpush2.msra.mxu0 0.0
    %833 = vmatprep.subr.mxu0 0.0
    %834 = vmatpush2.msra.mxu0 0.0
    %835 = vmatprep.subr.mxu0 0.0
    %836 = vmatpush2.msra.mxu0 0.0
    %837 = vmatprep.subr.mxu0 0.0
    %838 = vmatpush2.msra.mxu0 0.0
    %839 = vmatprep.subr.mxu0 0.0
    %840 = vmatpush2.msra.mxu0 0.0
    %841 = vmatprep.subr.mxu0 0.0
    %842 = vmatpush2.msra.mxu0 0.0
    %843 = vmatprep.mubr.f32.mxu0 0.0
    %844 = vmatmul.mubr.f32.gmra.mxu0 %v777
    %v845 = vpop.f32.mrf.mxu0
    %v846 = vadd.f32 0.0, %v845
    %v847 = vpop.f32.mrf.mxu0
    %848 = vdwg.mxu0
    %v849 = vld [vmem:[%s3] sm:$0xff]
    %s850 = scalar_lea.vmem %s2, 8
    %v851 = vld [vmem:[%s850] sm:$0xff]
    %v853 = vsel %vm601, %v851, 0
    %855 = vmatprep.subr.mxu0 0.0
    %856 = vmatpush1.msra.mxu0 0.0
    %857 = vmatprep.subr.mxu0 0.0
    %858 = vmatpush1.msra.mxu0 0.0
    %859 = vmatprep.subr.mxu0 0.0
    %860 = vmatpush1.msra.mxu0 0.0
    %861 = vmatprep.subr.mxu0 0.0
    %862 = vmatpush1.msra.mxu0 0.0
    %863 = vmatprep.subr.mxu0 0.0
    %864 = vmatpush1.msra.mxu0 0.0
    %865 = vmatprep.subr.mxu0 0.0
    %866 = vmatpush1.msra.mxu0 0.0
    %867 = vmatprep.subr.mxu0 0.0
    %868 = vmatpush1.msra.mxu0 0.0
    %869 = vmatprep.subr.mxu0 0.0
    %870 = vmatpush1.msra.mxu0 0.0
    %871 = vmatprep.subr.mxu0 0.0
    %872 = vmatpush1.msra.mxu0 %v772
    %873 = vmatprep.subr.mxu0 0.0
    %874 = vmatpush1.msra.mxu0 %v769
    %875 = vmatprep.subr.mxu0 0.0
    %876 = vmatpush1.msra.mxu0 %v764
    %877 = vmatprep.subr.mxu0 0.0
    %878 = vmatpush1.msra.mxu0 %v761
    %879 = vmatprep.subr.mxu0 0.0
    %880 = vmatpush1.msra.mxu0 %v756
    %881 = vmatprep.subr.mxu0 0.0
    %882 = vmatpush1.msra.mxu0 %v753
    %883 = vmatprep.subr.mxu0 0.0
    %884 = vmatpush1.msra.mxu0 %v748
    %885 = vmatprep.subr.mxu0 0.0
    %886 = vmatpush1.msra.mxu0 %v745
    %887 = vmatprep.subr.mxu0 0.0
    %888 = vmatpush2.msra.mxu0 0.0
    %889 = vmatprep.subr.mxu0 0.0
    %890 = vmatpush2.msra.mxu0 0.0
    %891 = vmatprep.subr.mxu0 0.0
    %892 = vmatpush2.msra.mxu0 0.0
    %893 = vmatprep.subr.mxu0 0.0
    %894 = vmatpush2.msra.mxu0 0.0
    %895 = vmatprep.subr.mxu0 0.0
    %896 = vmatpush2.msra.mxu0 0.0
    %897 = vmatprep.subr.mxu0 0.0
    %898 = vmatpush2.msra.mxu0 0.0
    %899 = vmatprep.subr.mxu0 0.0
    %900 = vmatpush2.msra.mxu0 0.0
    %901 = vmatprep.subr.mxu0 0.0
    %902 = vmatpush2.msra.mxu0 0.0
    %903 = vmatprep.subr.mxu0 0.0
    %904 = vmatpush2.msra.mxu0 0.0
    %905 = vmatprep.subr.mxu0 0.0
    %906 = vmatpush2.msra.mxu0 0.0
    %907 = vmatprep.subr.mxu0 0.0
    %908 = vmatpush2.msra.mxu0 0.0
    %909 = vmatprep.subr.mxu0 0.0
    %910 = vmatpush2.msra.mxu0 0.0
    %911 = vmatprep.subr.mxu0 0.0
    %912 = vmatpush2.msra.mxu0 0.0
    %913 = vmatprep.subr.mxu0 0.0
    %914 = vmatpush2.msra.mxu0 0.0
    %915 = vmatprep.subr.mxu0 0.0
    %916 = vmatpush2.msra.mxu0 0.0
    %917 = vmatprep.subr.mxu0 0.0
    %918 = vmatpush2.msra.mxu0 0.0
    %919 = vmatprep.mubr.f32.mxu0 0.0
    %920 = vmatmul.mubr.f32.gmra.mxu0 %v853
    %v921 = vpop.f32.mrf.mxu0
    %v922 = vadd.f32 0.0, %v921
    %v923 = vpop.f32.mrf.mxu0
    %924 = vdwg.mxu0
    %s925 = scalar_lea.vmem %s3, 8
    %v926 = vld [vmem:[%s925] sm:$0xff]
    %v928 = vsel %vm376, %v922, 0
    %930 = vmatprep.subr.mxu0 0.0
    %931 = vmatpush1.msra.mxu0 0.0
    %932 = vmatprep.subr.mxu0 0.0
    %933 = vmatpush1.msra.mxu0 0.0
    %934 = vmatprep.subr.mxu0 0.0
    %935 = vmatpush1.msra.mxu0 0.0
    %936 = vmatprep.subr.mxu0 0.0
    %937 = vmatpush1.msra.mxu0 0.0
    %938 = vmatprep.subr.mxu0 0.0
    %939 = vmatpush1.msra.mxu0 0.0
    %940 = vmatprep.subr.mxu0 0.0
    %941 = vmatpush1.msra.mxu0 0.0
    %942 = vmatprep.subr.mxu0 0.0
    %943 = vmatpush1.msra.mxu0 0.0
    %944 = vmatprep.subr.mxu0 0.0
    %945 = vmatpush1.msra.mxu0 0.0
    %946 = vmatprep.subr.mxu0 0.0
    %947 = vmatpush1.msra.mxu0 0.0
    %948 = vmatprep.subr.mxu0 0.0
    %949 = vmatpush1.msra.mxu0 0.0
    %950 = vmatprep.subr.mxu0 0.0
    %951 = vmatpush1.msra.mxu0 0.0
    %952 = vmatprep.subr.mxu0 0.0
    %953 = vmatpush1.msra.mxu0 0.0
    %954 = vmatprep.subr.mxu0 0.0
    %955 = vmatpush1.msra.mxu0 0.0
    %956 = vmatprep.subr.mxu0 0.0
    %957 = vmatpush1.msra.mxu0 0.0
    %958 = vmatprep.subr.mxu0 0.0
    %959 = vmatpush1.msra.mxu0 0.0
    %960 = vmatprep.subr.mxu0 0.0
    %961 = vmatpush1.msra.mxu0 %v926
    %962 = vmatprep.subr.mxu0 0.0
    %963 = vmatpush2.msra.mxu0 0.0
    %964 = vmatprep.subr.mxu0 0.0
    %965 = vmatpush2.msra.mxu0 0.0
    %966 = vmatprep.subr.mxu0 0.0
    %967 = vmatpush2.msra.mxu0 0.0
    %968 = vmatprep.subr.mxu0 0.0
    %969 = vmatpush2.msra.mxu0 0.0
    %970 = vmatprep.subr.mxu0 0.0
    %971 = vmatpush2.msra.mxu0 0.0
    %972 = vmatprep.subr.mxu0 0.0
    %973 = vmatpush2.msra.mxu0 0.0
    %974 = vmatprep.subr.mxu0 0.0
    %975 = vmatpush2.msra.mxu0 0.0
    %976 = vmatprep.subr.mxu0 0.0
    %977 = vmatpush2.msra.mxu0 0.0
    %978 = vmatprep.subr.mxu0 0.0
    %979 = vmatpush2.msra.mxu0 0.0
    %980 = vmatprep.subr.mxu0 0.0
    %981 = vmatpush2.msra.mxu0 0.0
    %982 = vmatprep.subr.mxu0 0.0
    %983 = vmatpush2.msra.mxu0 0.0
    %984 = vmatprep.subr.mxu0 0.0
    %985 = vmatpush2.msra.mxu0 0.0
    %986 = vmatprep.subr.mxu0 0.0
    %987 = vmatpush2.msra.mxu0 0.0
    %988 = vmatprep.subr.mxu0 0.0
    %989 = vmatpush2.msra.mxu0 0.0
    %990 = vmatprep.subr.mxu0 0.0
    %991 = vmatpush2.msra.mxu0 0.0
    %992 = vmatprep.subr.mxu0 0.0
    %993 = vmatpush2.msra.mxu0 0.0
    %994 = vmatprep.mubr.f32.mxu0 0.0
    %995 = vmatmul.mubr.f32.gmra.mxu0 %v928
    %v996 = vpop.f32.mrf.mxu0
    %v997 = vadd.f32 0.0, %v996
    %v998 = vpop.f32.mrf.mxu0
    %999 = vdwg.mxu0
    %v1001 = vsel %vm376, %v846, 0
    %1003 = vmatprep.subr.mxu0 0.0
    %1004 = vmatpush1.msra.mxu0 0.0
    %1005 = vmatprep.subr.mxu0 0.0
    %1006 = vmatpush1.msra.mxu0 0.0
    %1007 = vmatprep.subr.mxu0 0.0
    %1008 = vmatpush1.msra.mxu0 0.0
    %1009 = vmatprep.subr.mxu0 0.0
    %1010 = vmatpush1.msra.mxu0 0.0
    %1011 = vmatprep.subr.mxu0 0.0
    %1012 = vmatpush1.msra.mxu0 0.0
    %1013 = vmatprep.subr.mxu0 0.0
    %1014 = vmatpush1.msra.mxu0 0.0
    %1015 = vmatprep.subr.mxu0 0.0
    %1016 = vmatpush1.msra.mxu0 0.0
    %1017 = vmatprep.subr.mxu0 0.0
    %1018 = vmatpush1.msra.mxu0 0.0
    %1019 = vmatprep.subr.mxu0 0.0
    %1020 = vmatpush1.msra.mxu0 0.0
    %1021 = vmatprep.subr.mxu0 0.0
    %1022 = vmatpush1.msra.mxu0 0.0
    %1023 = vmatprep.subr.mxu0 0.0
    %1024 = vmatpush1.msra.mxu0 0.0
    %1025 = vmatprep.subr.mxu0 0.0
    %1026 = vmatpush1.msra.mxu0 0.0
    %1027 = vmatprep.subr.mxu0 0.0
    %1028 = vmatpush1.msra.mxu0 0.0
    %1029 = vmatprep.subr.mxu0 0.0
    %1030 = vmatpush1.msra.mxu0 0.0
    %1031 = vmatprep.subr.mxu0 0.0
    %1032 = vmatpush1.msra.mxu0 0.0
    %1033 = vmatprep.subr.mxu0 0.0
    %1034 = vmatpush1.msra.mxu0 %v849
    %1035 = vmatprep.subr.mxu0 0.0
    %1036 = vmatpush2.msra.mxu0 0.0
    %1037 = vmatprep.subr.mxu0 0.0
    %1038 = vmatpush2.msra.mxu0 0.0
    %1039 = vmatprep.subr.mxu0 0.0
    %1040 = vmatpush2.msra.mxu0 0.0
    %1041 = vmatprep.subr.mxu0 0.0
    %1042 = vmatpush2.msra.mxu0 0.0
    %1043 = vmatprep.subr.mxu0 0.0
    %1044 = vmatpush2.msra.mxu0 0.0
    %1045 = vmatprep.subr.mxu0 0.0
    %1046 = vmatpush2.msra.mxu0 0.0
    %1047 = vmatprep.subr.mxu0 0.0
    %1048 = vmatpush2.msra.mxu0 0.0
    %1049 = vmatprep.subr.mxu0 0.0
    %1050 = vmatpush2.msra.mxu0 0.0
    %1051 = vmatprep.subr.mxu0 0.0
    %1052 = vmatpush2.msra.mxu0 0.0
    %1053 = vmatprep.subr.mxu0 0.0
    %1054 = vmatpush2.msra.mxu0 0.0
    %1055 = vmatprep.subr.mxu0 0.0
    %1056 = vmatpush2.msra.mxu0 0.0
    %1057 = vmatprep.subr.mxu0 0.0
    %1058 = vmatpush2.msra.mxu0 0.0
    %1059 = vmatprep.subr.mxu0 0.0
    %1060 = vmatpush2.msra.mxu0 0.0
    %1061 = vmatprep.subr.mxu0 0.0
    %1062 = vmatpush2.msra.mxu0 0.0
    %1063 = vmatprep.subr.mxu0 0.0
    %1064 = vmatpush2.msra.mxu0 0.0
    %1065 = vmatprep.subr.mxu0 0.0
    %1066 = vmatpush2.msra.mxu0 0.0
    %1067 = vmatprep.mubr.f32.mxu0 0.0
    %1068 = vmatmul.mubr.f32.gmra.mxu0 %v1001
    %v1069 = vpop.f32.mrf.mxu0
    %v1070 = vadd.f32 %v997, %v1069
    %v1071 = vpop.f32.mrf.mxu0
    %1072 = vdwg.mxu0
    %s1073 = scalar_lea.vmem %s2, 16
    %v1074 = vld [vmem:[%s1073] sm:$0xff]
    %v1076 = vsel %vm601, %v1074, 0
    %1078 = vmatprep.subr.mxu0 0.0
    %1079 = vmatpush1.msra.mxu0 0.0
    %1080 = vmatprep.subr.mxu0 0.0
    %1081 = vmatpush1.msra.mxu0 0.0
    %1082 = vmatprep.subr.mxu0 0.0
    %1083 = vmatpush1.msra.mxu0 0.0
    %1084 = vmatprep.subr.mxu0 0.0
    %1085 = vmatpush1.msra.mxu0 0.0
    %1086 = vmatprep.subr.mxu0 0.0
    %1087 = vmatpush1.msra.mxu0 0.0
    %1088 = vmatprep.subr.mxu0 0.0
    %1089 = vmatpush1.msra.mxu0 0.0
    %1090 = vmatprep.subr.mxu0 0.0
    %1091 = vmatpush1.msra.mxu0 0.0
    %1092 = vmatprep.subr.mxu0 0.0
    %1093 = vmatpush1.msra.mxu0 0.0
    %1094 = vmatprep.subr.mxu0 0.0
    %1095 = vmatpush1.msra.mxu0 %v772
    %1096 = vmatprep.subr.mxu0 0.0
    %1097 = vmatpush1.msra.mxu0 %v769
    %1098 = vmatprep.subr.mxu0 0.0
    %1099 = vmatpush1.msra.mxu0 %v764
    %1100 = vmatprep.subr.mxu0 0.0
    %1101 = vmatpush1.msra.mxu0 %v761
    %1102 = vmatprep.subr.mxu0 0.0
    %1103 = vmatpush1.msra.mxu0 %v756
    %1104 = vmatprep.subr.mxu0 0.0
    %1105 = vmatpush1.msra.mxu0 %v753
    %1106 = vmatprep.subr.mxu0 0.0
    %1107 = vmatpush1.msra.mxu0 %v748
    %1108 = vmatprep.subr.mxu0 0.0
    %1109 = vmatpush1.msra.mxu0 %v745
    %1110 = vmatprep.subr.mxu0 0.0
    %1111 = vmatpush2.msra.mxu0 0.0
    %1112 = vmatprep.subr.mxu0 0.0
    %1113 = vmatpush2.msra.mxu0 0.0
    %1114 = vmatprep.subr.mxu0 0.0
    %1115 = vmatpush2.msra.mxu0 0.0
    %1116 = vmatprep.subr.mxu0 0.0
    %1117 = vmatpush2.msra.mxu0 0.0
    %1118 = vmatprep.subr.mxu0 0.0
    %1119 = vmatpush2.msra.mxu0 0.0
    %1120 = vmatprep.subr.mxu0 0.0
    %1121 = vmatpush2.msra.mxu0 0.0
    %1122 = vmatprep.subr.mxu0 0.0
    %1123 = vmatpush2.msra.mxu0 0.0
    %1124 = vmatprep.subr.mxu0 0.0
    %1125 = vmatpush2.msra.mxu0 0.0
    %1126 = vmatprep.subr.mxu0 0.0
    %1127 = vmatpush2.msra.mxu0 0.0
    %1128 = vmatprep.subr.mxu0 0.0
    %1129 = vmatpush2.msra.mxu0 0.0
    %1130 = vmatprep.subr.mxu0 0.0
    %1131 = vmatpush2.msra.mxu0 0.0
    %1132 = vmatprep.subr.mxu0 0.0
    %1133 = vmatpush2.msra.mxu0 0.0
    %1134 = vmatprep.subr.mxu0 0.0
    %1135 = vmatpush2.msra.mxu0 0.0
    %1136 = vmatprep.subr.mxu0 0.0
    %1137 = vmatpush2.msra.mxu0 0.0
    %1138 = vmatprep.subr.mxu0 0.0
    %1139 = vmatpush2.msra.mxu0 0.0
    %1140 = vmatprep.subr.mxu0 0.0
    %1141 = vmatpush2.msra.mxu0 0.0
    %1142 = vmatprep.mubr.f32.mxu0 0.0
    %1143 = vmatmul.mubr.f32.gmra.mxu0 %v1076
    %v1144 = vpop.f32.mrf.mxu0
    %v1145 = vadd.f32 0.0, %v1144
    %v1146 = vpop.f32.mrf.mxu0
    %1147 = vdwg.mxu0
    %s1148 = scalar_lea.vmem %s3, 16
    %v1149 = vld [vmem:[%s1148] sm:$0xff]
    %v1151 = vsel %vm376, %v1145, 0
    %1153 = vmatprep.subr.mxu0 0.0
    %1154 = vmatpush1.msra.mxu0 0.0
    %1155 = vmatprep.subr.mxu0 0.0
    %1156 = vmatpush1.msra.mxu0 0.0
    %1157 = vmatprep.subr.mxu0 0.0
    %1158 = vmatpush1.msra.mxu0 0.0
    %1159 = vmatprep.subr.mxu0 0.0
    %1160 = vmatpush1.msra.mxu0 0.0
    %1161 = vmatprep.subr.mxu0 0.0
    %1162 = vmatpush1.msra.mxu0 0.0
    %1163 = vmatprep.subr.mxu0 0.0
    %1164 = vmatpush1.msra.mxu0 0.0
    %1165 = vmatprep.subr.mxu0 0.0
    %1166 = vmatpush1.msra.mxu0 0.0
    %1167 = vmatprep.subr.mxu0 0.0
    %1168 = vmatpush1.msra.mxu0 0.0
    %1169 = vmatprep.subr.mxu0 0.0
    %1170 = vmatpush1.msra.mxu0 0.0
    %1171 = vmatprep.subr.mxu0 0.0
    %1172 = vmatpush1.msra.mxu0 0.0
    %1173 = vmatprep.subr.mxu0 0.0
    %1174 = vmatpush1.msra.mxu0 0.0
    %1175 = vmatprep.subr.mxu0 0.0
    %1176 = vmatpush1.msra.mxu0 0.0
    %1177 = vmatprep.subr.mxu0 0.0
    %1178 = vmatpush1.msra.mxu0 0.0
    %1179 = vmatprep.subr.mxu0 0.0
    %1180 = vmatpush1.msra.mxu0 0.0
    %1181 = vmatprep.subr.mxu0 0.0
    %1182 = vmatpush1.msra.mxu0 0.0
    %1183 = vmatprep.subr.mxu0 0.0
    %1184 = vmatpush1.msra.mxu0 %v1149
    %1185 = vmatprep.subr.mxu0 0.0
    %1186 = vmatpush2.msra.mxu0 0.0
    %1187 = vmatprep.subr.mxu0 0.0
    %1188 = vmatpush2.msra.mxu0 0.0
    %1189 = vmatprep.subr.mxu0 0.0
    %1190 = vmatpush2.msra.mxu0 0.0
    %1191 = vmatprep.subr.mxu0 0.0
    %1192 = vmatpush2.msra.mxu0 0.0
    %1193 = vmatprep.subr.mxu0 0.0
    %1194 = vmatpush2.msra.mxu0 0.0
    %1195 = vmatprep.subr.mxu0 0.0
    %1196 = vmatpush2.msra.mxu0 0.0
    %1197 = vmatprep.subr.mxu0 0.0
    %1198 = vmatpush2.msra.mxu0 0.0
    %1199 = vmatprep.subr.mxu0 0.0
    %1200 = vmatpush2.msra.mxu0 0.0
    %1201 = vmatprep.subr.mxu0 0.0
    %1202 = vmatpush2.msra.mxu0 0.0
    %1203 = vmatprep.subr.mxu0 0.0
    %1204 = vmatpush2.msra.mxu0 0.0
    %1205 = vmatprep.subr.mxu0 0.0
    %1206 = vmatpush2.msra.mxu0 0.0
    %1207 = vmatprep.subr.mxu0 0.0
    %1208 = vmatpush2.msra.mxu0 0.0
    %1209 = vmatprep.subr.mxu0 0.0
    %1210 = vmatpush2.msra.mxu0 0.0
    %1211 = vmatprep.subr.mxu0 0.0
    %1212 = vmatpush2.msra.mxu0 0.0
    %1213 = vmatprep.subr.mxu0 0.0
    %1214 = vmatpush2.msra.mxu0 0.0
    %1215 = vmatprep.subr.mxu0 0.0
    %1216 = vmatpush2.msra.mxu0 0.0
    %1217 = vmatprep.mubr.f32.mxu0 0.0
    %1218 = vmatmul.mubr.f32.gmra.mxu0 %v1151
    %v1219 = vpop.f32.mrf.mxu0
    %v1220 = vadd.f32 0.0, %v1219
    %v1221 = vpop.f32.mrf.mxu0
    %1222 = vdwg.mxu0
    %v1223 = vadd.f32 %v1070, %v1220
    %s1224 = scalar_lea.vmem %s2, 24
    %v1225 = vld [vmem:[%s1224] sm:$0xff]
    %v1227 = vsel %vm601, %v1225, 0
    %1229 = vmatprep.subr.mxu0 0.0
    %1230 = vmatpush1.msra.mxu0 0.0
    %1231 = vmatprep.subr.mxu0 0.0
    %1232 = vmatpush1.msra.mxu0 0.0
    %1233 = vmatprep.subr.mxu0 0.0
    %1234 = vmatpush1.msra.mxu0 0.0
    %1235 = vmatprep.subr.mxu0 0.0
    %1236 = vmatpush1.msra.mxu0 0.0
    %1237 = vmatprep.subr.mxu0 0.0
    %1238 = vmatpush1.msra.mxu0 0.0
    %1239 = vmatprep.subr.mxu0 0.0
    %1240 = vmatpush1.msra.mxu0 0.0
    %1241 = vmatprep.subr.mxu0 0.0
    %1242 = vmatpush1.msra.mxu0 0.0
    %1243 = vmatprep.subr.mxu0 0.0
    %1244 = vmatpush1.msra.mxu0 0.0
    %1245 = vmatprep.subr.mxu0 0.0
    %1246 = vmatpush1.msra.mxu0 %v772
    %1247 = vmatprep.subr.mxu0 0.0
    %1248 = vmatpush1.msra.mxu0 %v769
    %1249 = vmatprep.subr.mxu0 0.0
    %1250 = vmatpush1.msra.mxu0 %v764
    %1251 = vmatprep.subr.mxu0 0.0
    %1252 = vmatpush1.msra.mxu0 %v761
    %1253 = vmatprep.subr.mxu0 0.0
    %1254 = vmatpush1.msra.mxu0 %v756
    %1255 = vmatprep.subr.mxu0 0.0
    %1256 = vmatpush1.msra.mxu0 %v753
    %1257 = vmatprep.subr.mxu0 0.0
    %1258 = vmatpush1.msra.mxu0 %v748
    %1259 = vmatprep.subr.mxu0 0.0
    %1260 = vmatpush1.msra.mxu0 %v745
    %1261 = vmatprep.subr.mxu0 0.0
    %1262 = vmatpush2.msra.mxu0 0.0
    %1263 = vmatprep.subr.mxu0 0.0
    %1264 = vmatpush2.msra.mxu0 0.0
    %1265 = vmatprep.subr.mxu0 0.0
    %1266 = vmatpush2.msra.mxu0 0.0
    %1267 = vmatprep.subr.mxu0 0.0
    %1268 = vmatpush2.msra.mxu0 0.0
    %1269 = vmatprep.subr.mxu0 0.0
    %1270 = vmatpush2.msra.mxu0 0.0
    %1271 = vmatprep.subr.mxu0 0.0
    %1272 = vmatpush2.msra.mxu0 0.0
    %1273 = vmatprep.subr.mxu0 0.0
    %1274 = vmatpush2.msra.mxu0 0.0
    %1275 = vmatprep.subr.mxu0 0.0
    %1276 = vmatpush2.msra.mxu0 0.0
    %1277 = vmatprep.subr.mxu0 0.0
    %1278 = vmatpush2.msra.mxu0 0.0
    %1279 = vmatprep.subr.mxu0 0.0
    %1280 = vmatpush2.msra.mxu0 0.0
    %1281 = vmatprep.subr.mxu0 0.0
    %1282 = vmatpush2.msra.mxu0 0.0
    %1283 = vmatprep.subr.mxu0 0.0
    %1284 = vmatpush2.msra.mxu0 0.0
    %1285 = vmatprep.subr.mxu0 0.0
    %1286 = vmatpush2.msra.mxu0 0.0
    %1287 = vmatprep.subr.mxu0 0.0
    %1288 = vmatpush2.msra.mxu0 0.0
    %1289 = vmatprep.subr.mxu0 0.0
    %1290 = vmatpush2.msra.mxu0 0.0
    %1291 = vmatprep.subr.mxu0 0.0
    %1292 = vmatpush2.msra.mxu0 0.0
    %1293 = vmatprep.mubr.f32.mxu0 0.0
    %1294 = vmatmul.mubr.f32.gmra.mxu0 %v1227
    %v1295 = vpop.f32.mrf.mxu0
    %v1296 = vadd.f32 0.0, %v1295
    %v1297 = vpop.f32.mrf.mxu0
    %1298 = vdwg.mxu0
    %s1299 = scalar_lea.vmem %s3, 24
    %v1300 = vld [vmem:[%s1299] sm:$0xff]
    %v1302 = vsel %vm376, %v1296, 0
    %1304 = vmatprep.subr.mxu0 0.0
    %1305 = vmatpush1.msra.mxu0 0.0
    %1306 = vmatprep.subr.mxu0 0.0
    %1307 = vmatpush1.msra.mxu0 0.0
    %1308 = vmatprep.subr.mxu0 0.0
    %1309 = vmatpush1.msra.mxu0 0.0
    %1310 = vmatprep.subr.mxu0 0.0
    %1311 = vmatpush1.msra.mxu0 0.0
    %1312 = vmatprep.subr.mxu0 0.0
    %1313 = vmatpush1.msra.mxu0 0.0
    %1314 = vmatprep.subr.mxu0 0.0
    %1315 = vmatpush1.msra.mxu0 0.0
    %1316 = vmatprep.subr.mxu0 0.0
    %1317 = vmatpush1.msra.mxu0 0.0
    %1318 = vmatprep.subr.mxu0 0.0
    %1319 = vmatpush1.msra.mxu0 0.0
    %1320 = vmatprep.subr.mxu0 0.0
    %1321 = vmatpush1.msra.mxu0 0.0
    %1322 = vmatprep.subr.mxu0 0.0
    %1323 = vmatpush1.msra.mxu0 0.0
    %1324 = vmatprep.subr.mxu0 0.0
    %1325 = vmatpush1.msra.mxu0 0.0
    %1326 = vmatprep.subr.mxu0 0.0
    %1327 = vmatpush1.msra.mxu0 0.0
    %1328 = vmatprep.subr.mxu0 0.0
    %1329 = vmatpush1.msra.mxu0 0.0
    %1330 = vmatprep.subr.mxu0 0.0
    %1331 = vmatpush1.msra.mxu0 0.0
    %1332 = vmatprep.subr.mxu0 0.0
    %1333 = vmatpush1.msra.mxu0 0.0
    %1334 = vmatprep.subr.mxu0 0.0
    %1335 = vmatpush1.msra.mxu0 %v1300
    %1336 = vmatprep.subr.mxu0 0.0
    %1337 = vmatpush2.msra.mxu0 0.0
    %1338 = vmatprep.subr.mxu0 0.0
    %1339 = vmatpush2.msra.mxu0 0.0
    %1340 = vmatprep.subr.mxu0 0.0
    %1341 = vmatpush2.msra.mxu0 0.0
    %1342 = vmatprep.subr.mxu0 0.0
    %1343 = vmatpush2.msra.mxu0 0.0
    %1344 = vmatprep.subr.mxu0 0.0
    %1345 = vmatpush2.msra.mxu0 0.0
    %1346 = vmatprep.subr.mxu0 0.0
    %1347 = vmatpush2.msra.mxu0 0.0
    %1348 = vmatprep.subr.mxu0 0.0
    %1349 = vmatpush2.msra.mxu0 0.0
    %1350 = vmatprep.subr.mxu0 0.0
    %1351 = vmatpush2.msra.mxu0 0.0
    %1352 = vmatprep.subr.mxu0 0.0
    %1353 = vmatpush2.msra.mxu0 0.0
    %1354 = vmatprep.subr.mxu0 0.0
    %1355 = vmatpush2.msra.mxu0 0.0
    %1356 = vmatprep.subr.mxu0 0.0
    %1357 = vmatpush2.msra.mxu0 0.0
    %1358 = vmatprep.subr.mxu0 0.0
    %1359 = vmatpush2.msra.mxu0 0.0
    %1360 = vmatprep.subr.mxu0 0.0
    %1361 = vmatpush2.msra.mxu0 0.0
    %1362 = vmatprep.subr.mxu0 0.0
    %1363 = vmatpush2.msra.mxu0 0.0
    %1364 = vmatprep.subr.mxu0 0.0
    %1365 = vmatpush2.msra.mxu0 0.0
    %1366 = vmatprep.subr.mxu0 0.0
    %1367 = vmatpush2.msra.mxu0 0.0
    %1368 = vmatprep.mubr.f32.mxu0 0.0
    %1369 = vmatmul.mubr.f32.gmra.mxu0 %v1302
    %v1370 = vpop.f32.mrf.mxu0
    %v1371 = vadd.f32 0.0, %v1370
    %v1372 = vpop.f32.mrf.mxu0
    %1373 = vdwg.mxu0
    %v1374 = vadd.f32 %v1223, %v1371
    %s1375 = scalar_lea.vmem %s2, 32
    %v1376 = vld [vmem:[%s1375] sm:$0xff]
    %v1378 = vsel %vm601, %v1376, 0
    %1380 = vmatprep.subr.mxu0 0.0
    %1381 = vmatpush1.msra.mxu0 0.0
    %1382 = vmatprep.subr.mxu0 0.0
    %1383 = vmatpush1.msra.mxu0 0.0
    %1384 = vmatprep.subr.mxu0 0.0
    %1385 = vmatpush1.msra.mxu0 0.0
    %1386 = vmatprep.subr.mxu0 0.0
    %1387 = vmatpush1.msra.mxu0 0.0
    %1388 = vmatprep.subr.mxu0 0.0
    %1389 = vmatpush1.msra.mxu0 0.0
    %1390 = vmatprep.subr.mxu0 0.0
    %1391 = vmatpush1.msra.mxu0 0.0
    %1392 = vmatprep.subr.mxu0 0.0
    %1393 = vmatpush1.msra.mxu0 0.0
    %1394 = vmatprep.subr.mxu0 0.0
    %1395 = vmatpush1.msra.mxu0 0.0
    %1396 = vmatprep.subr.mxu0 0.0
    %1397 = vmatpush1.msra.mxu0 %v772
    %1398 = vmatprep.subr.mxu0 0.0
    %1399 = vmatpush1.msra.mxu0 %v769
    %1400 = vmatprep.subr.mxu0 0.0
    %1401 = vmatpush1.msra.mxu0 %v764
    %1402 = vmatprep.subr.mxu0 0.0
    %1403 = vmatpush1.msra.mxu0 %v761
    %1404 = vmatprep.subr.mxu0 0.0
    %1405 = vmatpush1.msra.mxu0 %v756
    %1406 = vmatprep.subr.mxu0 0.0
    %1407 = vmatpush1.msra.mxu0 %v753
    %1408 = vmatprep.subr.mxu0 0.0
    %1409 = vmatpush1.msra.mxu0 %v748
    %1410 = vmatprep.subr.mxu0 0.0
    %1411 = vmatpush1.msra.mxu0 %v745
    %1412 = vmatprep.subr.mxu0 0.0
    %1413 = vmatpush2.msra.mxu0 0.0
    %1414 = vmatprep.subr.mxu0 0.0
    %1415 = vmatpush2.msra.mxu0 0.0
    %1416 = vmatprep.subr.mxu0 0.0
    %1417 = vmatpush2.msra.mxu0 0.0
    %1418 = vmatprep.subr.mxu0 0.0
    %1419 = vmatpush2.msra.mxu0 0.0
    %1420 = vmatprep.subr.mxu0 0.0
    %1421 = vmatpush2.msra.mxu0 0.0
    %1422 = vmatprep.subr.mxu0 0.0
    %1423 = vmatpush2.msra.mxu0 0.0
    %1424 = vmatprep.subr.mxu0 0.0
    %1425 = vmatpush2.msra.mxu0 0.0
    %1426 = vmatprep.subr.mxu0 0.0
    %1427 = vmatpush2.msra.mxu0 0.0
    %1428 = vmatprep.subr.mxu0 0.0
    %1429 = vmatpush2.msra.mxu0 0.0
    %1430 = vmatprep.subr.mxu0 0.0
    %1431 = vmatpush2.msra.mxu0 0.0
    %1432 = vmatprep.subr.mxu0 0.0
    %1433 = vmatpush2.msra.mxu0 0.0
    %1434 = vmatprep.subr.mxu0 0.0
    %1435 = vmatpush2.msra.mxu0 0.0
    %1436 = vmatprep.subr.mxu0 0.0
    %1437 = vmatpush2.msra.mxu0 0.0
    %1438 = vmatprep.subr.mxu0 0.0
    %1439 = vmatpush2.msra.mxu0 0.0
    %1440 = vmatprep.subr.mxu0 0.0
    %1441 = vmatpush2.msra.mxu0 0.0
    %1442 = vmatprep.subr.mxu0 0.0
    %1443 = vmatpush2.msra.mxu0 0.0
    %1444 = vmatprep.mubr.f32.mxu0 0.0
    %1445 = vmatmul.mubr.f32.gmra.mxu0 %v1378
    %v1446 = vpop.f32.mrf.mxu0
    %v1447 = vadd.f32 0.0, %v1446
    %v1448 = vpop.f32.mrf.mxu0
    %1449 = vdwg.mxu0
    %s1450 = scalar_lea.vmem %s3, 32
    %v1451 = vld [vmem:[%s1450] sm:$0xff]
    %v1453 = vsel %vm376, %v1447, 0
    %1455 = vmatprep.subr.mxu0 0.0
    %1456 = vmatpush1.msra.mxu0 0.0
    %1457 = vmatprep.subr.mxu0 0.0
    %1458 = vmatpush1.msra.mxu0 0.0
    %1459 = vmatprep.subr.mxu0 0.0
    %1460 = vmatpush1.msra.mxu0 0.0
    %1461 = vmatprep.subr.mxu0 0.0
    %1462 = vmatpush1.msra.mxu0 0.0
    %1463 = vmatprep.subr.mxu0 0.0
    %1464 = vmatpush1.msra.mxu0 0.0
    %1465 = vmatprep.subr.mxu0 0.0
    %1466 = vmatpush1.msra.mxu0 0.0
    %1467 = vmatprep.subr.mxu0 0.0
    %1468 = vmatpush1.msra.mxu0 0.0
    %1469 = vmatprep.subr.mxu0 0.0
    %1470 = vmatpush1.msra.mxu0 0.0
    %1471 = vmatprep.subr.mxu0 0.0
    %1472 = vmatpush1.msra.mxu0 0.0
    %1473 = vmatprep.subr.mxu0 0.0
    %1474 = vmatpush1.msra.mxu0 0.0
    %1475 = vmatprep.subr.mxu0 0.0
    %1476 = vmatpush1.msra.mxu0 0.0
    %1477 = vmatprep.subr.mxu0 0.0
    %1478 = vmatpush1.msra.mxu0 0.0
    %1479 = vmatprep.subr.mxu0 0.0
    %1480 = vmatpush1.msra.mxu0 0.0
    %1481 = vmatprep.subr.mxu0 0.0
    %1482 = vmatpush1.msra.mxu0 0.0
    %1483 = vmatprep.subr.mxu0 0.0
    %1484 = vmatpush1.msra.mxu0 0.0
    %1485 = vmatprep.subr.mxu0 0.0
    %1486 = vmatpush1.msra.mxu0 %v1451
    %1487 = vmatprep.subr.mxu0 0.0
    %1488 = vmatpush2.msra.mxu0 0.0
    %1489 = vmatprep.subr.mxu0 0.0
    %1490 = vmatpush2.msra.mxu0 0.0
    %1491 = vmatprep.subr.mxu0 0.0
    %1492 = vmatpush2.msra.mxu0 0.0
    %1493 = vmatprep.subr.mxu0 0.0
    %1494 = vmatpush2.msra.mxu0 0.0
    %1495 = vmatprep.subr.mxu0 0.0
    %1496 = vmatpush2.msra.mxu0 0.0
    %1497 = vmatprep.subr.mxu0 0.0
    %1498 = vmatpush2.msra.mxu0 0.0
    %1499 = vmatprep.subr.mxu0 0.0
    %1500 = vmatpush2.msra.mxu0 0.0
    %1501 = vmatprep.subr.mxu0 0.0
    %1502 = vmatpush2.msra.mxu0 0.0
    %1503 = vmatprep.subr.mxu0 0.0
    %1504 = vmatpush2.msra.mxu0 0.0
    %1505 = vmatprep.subr.mxu0 0.0
    %1506 = vmatpush2.msra.mxu0 0.0
    %1507 = vmatprep.subr.mxu0 0.0
    %1508 = vmatpush2.msra.mxu0 0.0
    %1509 = vmatprep.subr.mxu0 0.0
    %1510 = vmatpush2.msra.mxu0 0.0
    %1511 = vmatprep.subr.mxu0 0.0
    %1512 = vmatpush2.msra.mxu0 0.0
    %1513 = vmatprep.subr.mxu0 0.0
    %1514 = vmatpush2.msra.mxu0 0.0
    %1515 = vmatprep.subr.mxu0 0.0
    %1516 = vmatpush2.msra.mxu0 0.0
    %1517 = vmatprep.subr.mxu0 0.0
    %1518 = vmatpush2.msra.mxu0 0.0
    %1519 = vmatprep.mubr.f32.mxu0 0.0
    %1520 = vmatmul.mubr.f32.gmra.mxu0 %v1453
    %v1521 = vpop.f32.mrf.mxu0
    %v1522 = vadd.f32 0.0, %v1521
    %v1523 = vpop.f32.mrf.mxu0
    %1524 = vdwg.mxu0
    %v1525 = vadd.f32 %v1374, %v1522
    %s1526 = scalar_lea.vmem %s2, 40
    %v1527 = vld [vmem:[%s1526] sm:$0xff]
    %v1529 = vsel %vm601, %v1527, 0
    %1531 = vmatprep.subr.mxu0 0.0
    %1532 = vmatpush1.msra.mxu0 0.0
    %1533 = vmatprep.subr.mxu0 0.0
    %1534 = vmatpush1.msra.mxu0 0.0
    %1535 = vmatprep.subr.mxu0 0.0
    %1536 = vmatpush1.msra.mxu0 0.0
    %1537 = vmatprep.subr.mxu0 0.0
    %1538 = vmatpush1.msra.mxu0 0.0
    %1539 = vmatprep.subr.mxu0 0.0
    %1540 = vmatpush1.msra.mxu0 0.0
    %1541 = vmatprep.subr.mxu0 0.0
    %1542 = vmatpush1.msra.mxu0 0.0
    %1543 = vmatprep.subr.mxu0 0.0
    %1544 = vmatpush1.msra.mxu0 0.0
    %1545 = vmatprep.subr.mxu0 0.0
    %1546 = vmatpush1.msra.mxu0 0.0
    %1547 = vmatprep.subr.mxu0 0.0
    %1548 = vmatpush1.msra.mxu0 %v772
    %1549 = vmatprep.subr.mxu0 0.0
    %1550 = vmatpush1.msra.mxu0 %v769
    %1551 = vmatprep.subr.mxu0 0.0
    %1552 = vmatpush1.msra.mxu0 %v764
    %1553 = vmatprep.subr.mxu0 0.0
    %1554 = vmatpush1.msra.mxu0 %v761
    %1555 = vmatprep.subr.mxu0 0.0
    %1556 = vmatpush1.msra.mxu0 %v756
    %1557 = vmatprep.subr.mxu0 0.0
    %1558 = vmatpush1.msra.mxu0 %v753
    %1559 = vmatprep.subr.mxu0 0.0
    %1560 = vmatpush1.msra.mxu0 %v748
    %1561 = vmatprep.subr.mxu0 0.0
    %1562 = vmatpush1.msra.mxu0 %v745
    %1563 = vmatprep.subr.mxu0 0.0
    %1564 = vmatpush2.msra.mxu0 0.0
    %1565 = vmatprep.subr.mxu0 0.0
    %1566 = vmatpush2.msra.mxu0 0.0
    %1567 = vmatprep.subr.mxu0 0.0
    %1568 = vmatpush2.msra.mxu0 0.0
    %1569 = vmatprep.subr.mxu0 0.0
    %1570 = vmatpush2.msra.mxu0 0.0
    %1571 = vmatprep.subr.mxu0 0.0
    %1572 = vmatpush2.msra.mxu0 0.0
    %1573 = vmatprep.subr.mxu0 0.0
    %1574 = vmatpush2.msra.mxu0 0.0
    %1575 = vmatprep.subr.mxu0 0.0
    %1576 = vmatpush2.msra.mxu0 0.0
    %1577 = vmatprep.subr.mxu0 0.0
    %1578 = vmatpush2.msra.mxu0 0.0
    %1579 = vmatprep.subr.mxu0 0.0
    %1580 = vmatpush2.msra.mxu0 0.0
    %1581 = vmatprep.subr.mxu0 0.0
    %1582 = vmatpush2.msra.mxu0 0.0
    %1583 = vmatprep.subr.mxu0 0.0
    %1584 = vmatpush2.msra.mxu0 0.0
    %1585 = vmatprep.subr.mxu0 0.0
    %1586 = vmatpush2.msra.mxu0 0.0
    %1587 = vmatprep.subr.mxu0 0.0
    %1588 = vmatpush2.msra.mxu0 0.0
    %1589 = vmatprep.subr.mxu0 0.0
    %1590 = vmatpush2.msra.mxu0 0.0
    %1591 = vmatprep.subr.mxu0 0.0
    %1592 = vmatpush2.msra.mxu0 0.0
    %1593 = vmatprep.subr.mxu0 0.0
    %1594 = vmatpush2.msra.mxu0 0.0
    %1595 = vmatprep.mubr.f32.mxu0 0.0
    %1596 = vmatmul.mubr.f32.gmra.mxu0 %v1529
    %v1597 = vpop.f32.mrf.mxu0
    %v1598 = vadd.f32 0.0, %v1597
    %v1599 = vpop.f32.mrf.mxu0
    %1600 = vdwg.mxu0
    %s1601 = scalar_lea.vmem %s3, 40
    %v1602 = vld [vmem:[%s1601] sm:$0xff]
    %v1604 = vsel %vm376, %v1598, 0
    %1606 = vmatprep.subr.mxu0 0.0
    %1607 = vmatpush1.msra.mxu0 0.0
    %1608 = vmatprep.subr.mxu0 0.0
    %1609 = vmatpush1.msra.mxu0 0.0
    %1610 = vmatprep.subr.mxu0 0.0
    %1611 = vmatpush1.msra.mxu0 0.0
    %1612 = vmatprep.subr.mxu0 0.0
    %1613 = vmatpush1.msra.mxu0 0.0
    %1614 = vmatprep.subr.mxu0 0.0
    %1615 = vmatpush1.msra.mxu0 0.0
    %1616 = vmatprep.subr.mxu0 0.0
    %1617 = vmatpush1.msra.mxu0 0.0
    %1618 = vmatprep.subr.mxu0 0.0
    %1619 = vmatpush1.msra.mxu0 0.0
    %1620 = vmatprep.subr.mxu0 0.0
    %1621 = vmatpush1.msra.mxu0 0.0
    %1622 = vmatprep.subr.mxu0 0.0
    %1623 = vmatpush1.msra.mxu0 0.0
    %1624 = vmatprep.subr.mxu0 0.0
    %1625 = vmatpush1.msra.mxu0 0.0
    %1626 = vmatprep.subr.mxu0 0.0
    %1627 = vmatpush1.msra.mxu0 0.0
    %1628 = vmatprep.subr.mxu0 0.0
    %1629 = vmatpush1.msra.mxu0 0.0
    %1630 = vmatprep.subr.mxu0 0.0
    %1631 = vmatpush1.msra.mxu0 0.0
    %1632 = vmatprep.subr.mxu0 0.0
    %1633 = vmatpush1.msra.mxu0 0.0
    %1634 = vmatprep.subr.mxu0 0.0
    %1635 = vmatpush1.msra.mxu0 0.0
    %1636 = vmatprep.subr.mxu0 0.0
    %1637 = vmatpush1.msra.mxu0 %v1602
    %1638 = vmatprep.subr.mxu0 0.0
    %1639 = vmatpush2.msra.mxu0 0.0
    %1640 = vmatprep.subr.mxu0 0.0
    %1641 = vmatpush2.msra.mxu0 0.0
    %1642 = vmatprep.subr.mxu0 0.0
    %1643 = vmatpush2.msra.mxu0 0.0
    %1644 = vmatprep.subr.mxu0 0.0
    %1645 = vmatpush2.msra.mxu0 0.0
    %1646 = vmatprep.subr.mxu0 0.0
    %1647 = vmatpush2.msra.mxu0 0.0
    %1648 = vmatprep.subr.mxu0 0.0
    %1649 = vmatpush2.msra.mxu0 0.0
    %1650 = vmatprep.subr.mxu0 0.0
    %1651 = vmatpush2.msra.mxu0 0.0
    %1652 = vmatprep.subr.mxu0 0.0
    %1653 = vmatpush2.msra.mxu0 0.0
    %1654 = vmatprep.subr.mxu0 0.0
    %1655 = vmatpush2.msra.mxu0 0.0
    %1656 = vmatprep.subr.mxu0 0.0
    %1657 = vmatpush2.msra.mxu0 0.0
    %1658 = vmatprep.subr.mxu0 0.0
    %1659 = vmatpush2.msra.mxu0 0.0
    %1660 = vmatprep.subr.mxu0 0.0
    %1661 = vmatpush2.msra.mxu0 0.0
    %1662 = vmatprep.subr.mxu0 0.0
    %1663 = vmatpush2.msra.mxu0 0.0
    %1664 = vmatprep.subr.mxu0 0.0
    %1665 = vmatpush2.msra.mxu0 0.0
    %1666 = vmatprep.subr.mxu0 0.0
    %1667 = vmatpush2.msra.mxu0 0.0
    %1668 = vmatprep.subr.mxu0 0.0
    %1669 = vmatpush2.msra.mxu0 0.0
    %1670 = vmatprep.mubr.f32.mxu0 0.0
    %1671 = vmatmul.mubr.f32.gmra.mxu0 %v1604
    %v1672 = vpop.f32.mrf.mxu0
    %v1673 = vadd.f32 0.0, %v1672
    %v1674 = vpop.f32.mrf.mxu0
    %1675 = vdwg.mxu0
    %v1676 = vadd.f32 %v1525, %v1673
    %s1677 = scalar_lea.vmem %s2, 48
    %v1678 = vld [vmem:[%s1677] sm:$0xff]
    %v1680 = vsel %vm601, %v1678, 0
    %1682 = vmatprep.subr.mxu0 0.0
    %1683 = vmatpush1.msra.mxu0 0.0
    %1684 = vmatprep.subr.mxu0 0.0
    %1685 = vmatpush1.msra.mxu0 0.0
    %1686 = vmatprep.subr.mxu0 0.0
    %1687 = vmatpush1.msra.mxu0 0.0
    %1688 = vmatprep.subr.mxu0 0.0
    %1689 = vmatpush1.msra.mxu0 0.0
    %1690 = vmatprep.subr.mxu0 0.0
    %1691 = vmatpush1.msra.mxu0 0.0
    %1692 = vmatprep.subr.mxu0 0.0
    %1693 = vmatpush1.msra.mxu0 0.0
    %1694 = vmatprep.subr.mxu0 0.0
    %1695 = vmatpush1.msra.mxu0 0.0
    %1696 = vmatprep.subr.mxu0 0.0
    %1697 = vmatpush1.msra.mxu0 0.0
    %1698 = vmatprep.subr.mxu0 0.0
    %1699 = vmatpush1.msra.mxu0 %v772
    %1700 = vmatprep.subr.mxu0 0.0
    %1701 = vmatpush1.msra.mxu0 %v769
    %1702 = vmatprep.subr.mxu0 0.0
    %1703 = vmatpush1.msra.mxu0 %v764
    %1704 = vmatprep.subr.mxu0 0.0
    %1705 = vmatpush1.msra.mxu0 %v761
    %1706 = vmatprep.subr.mxu0 0.0
    %1707 = vmatpush1.msra.mxu0 %v756
    %1708 = vmatprep.subr.mxu0 0.0
    %1709 = vmatpush1.msra.mxu0 %v753
    %1710 = vmatprep.subr.mxu0 0.0
    %1711 = vmatpush1.msra.mxu0 %v748
    %1712 = vmatprep.subr.mxu0 0.0
    %1713 = vmatpush1.msra.mxu0 %v745
    %1714 = vmatprep.subr.mxu0 0.0
    %1715 = vmatpush2.msra.mxu0 0.0
    %1716 = vmatprep.subr.mxu0 0.0
    %1717 = vmatpush2.msra.mxu0 0.0
    %1718 = vmatprep.subr.mxu0 0.0
    %1719 = vmatpush2.msra.mxu0 0.0
    %1720 = vmatprep.subr.mxu0 0.0
    %1721 = vmatpush2.msra.mxu0 0.0
    %1722 = vmatprep.subr.mxu0 0.0
    %1723 = vmatpush2.msra.mxu0 0.0
    %1724 = vmatprep.subr.mxu0 0.0
    %1725 = vmatpush2.msra.mxu0 0.0
    %1726 = vmatprep.subr.mxu0 0.0
    %1727 = vmatpush2.msra.mxu0 0.0
    %1728 = vmatprep.subr.mxu0 0.0
    %1729 = vmatpush2.msra.mxu0 0.0
    %1730 = vmatprep.subr.mxu0 0.0
    %1731 = vmatpush2.msra.mxu0 0.0
    %1732 = vmatprep.subr.mxu0 0.0
    %1733 = vmatpush2.msra.mxu0 0.0
    %1734 = vmatprep.subr.mxu0 0.0
    %1735 = vmatpush2.msra.mxu0 0.0
    %1736 = vmatprep.subr.mxu0 0.0
    %1737 = vmatpush2.msra.mxu0 0.0
    %1738 = vmatprep.subr.mxu0 0.0
    %1739 = vmatpush2.msra.mxu0 0.0
    %1740 = vmatprep.subr.mxu0 0.0
    %1741 = vmatpush2.msra.mxu0 0.0
    %1742 = vmatprep.subr.mxu0 0.0
    %1743 = vmatpush2.msra.mxu0 0.0
    %1744 = vmatprep.subr.mxu0 0.0
    %1745 = vmatpush2.msra.mxu0 0.0
    %1746 = vmatprep.mubr.f32.mxu0 0.0
    %1747 = vmatmul.mubr.f32.gmra.mxu0 %v1680
    %v1748 = vpop.f32.mrf.mxu0
    %v1749 = vadd.f32 0.0, %v1748
    %v1750 = vpop.f32.mrf.mxu0
    %1751 = vdwg.mxu0
    %s1752 = scalar_lea.vmem %s3, 48
    %v1753 = vld [vmem:[%s1752] sm:$0xff]
    %v1755 = vsel %vm376, %v1749, 0
    %1757 = vmatprep.subr.mxu0 0.0
    %1758 = vmatpush1.msra.mxu0 0.0
    %1759 = vmatprep.subr.mxu0 0.0
    %1760 = vmatpush1.msra.mxu0 0.0
    %1761 = vmatprep.subr.mxu0 0.0
    %1762 = vmatpush1.msra.mxu0 0.0
    %1763 = vmatprep.subr.mxu0 0.0
    %1764 = vmatpush1.msra.mxu0 0.0
    %1765 = vmatprep.subr.mxu0 0.0
    %1766 = vmatpush1.msra.mxu0 0.0
    %1767 = vmatprep.subr.mxu0 0.0
    %1768 = vmatpush1.msra.mxu0 0.0
    %1769 = vmatprep.subr.mxu0 0.0
    %1770 = vmatpush1.msra.mxu0 0.0
    %1771 = vmatprep.subr.mxu0 0.0
    %1772 = vmatpush1.msra.mxu0 0.0
    %1773 = vmatprep.subr.mxu0 0.0
    %1774 = vmatpush1.msra.mxu0 0.0
    %1775 = vmatprep.subr.mxu0 0.0
    %1776 = vmatpush1.msra.mxu0 0.0
    %1777 = vmatprep.subr.mxu0 0.0
    %1778 = vmatpush1.msra.mxu0 0.0
    %1779 = vmatprep.subr.mxu0 0.0
    %1780 = vmatpush1.msra.mxu0 0.0
    %1781 = vmatprep.subr.mxu0 0.0
    %1782 = vmatpush1.msra.mxu0 0.0
    %1783 = vmatprep.subr.mxu0 0.0
    %1784 = vmatpush1.msra.mxu0 0.0
    %1785 = vmatprep.subr.mxu0 0.0
    %1786 = vmatpush1.msra.mxu0 0.0
    %1787 = vmatprep.subr.mxu0 0.0
    %1788 = vmatpush1.msra.mxu0 %v1753
    %1789 = vmatprep.subr.mxu0 0.0
    %1790 = vmatpush2.msra.mxu0 0.0
    %1791 = vmatprep.subr.mxu0 0.0
    %1792 = vmatpush2.msra.mxu0 0.0
    %1793 = vmatprep.subr.mxu0 0.0
    %1794 = vmatpush2.msra.mxu0 0.0
    %1795 = vmatprep.subr.mxu0 0.0
    %1796 = vmatpush2.msra.mxu0 0.0
    %1797 = vmatprep.subr.mxu0 0.0
    %1798 = vmatpush2.msra.mxu0 0.0
    %1799 = vmatprep.subr.mxu0 0.0
    %1800 = vmatpush2.msra.mxu0 0.0
    %1801 = vmatprep.subr.mxu0 0.0
    %1802 = vmatpush2.msra.mxu0 0.0
    %1803 = vmatprep.subr.mxu0 0.0
    %1804 = vmatpush2.msra.mxu0 0.0
    %1805 = vmatprep.subr.mxu0 0.0
    %1806 = vmatpush2.msra.mxu0 0.0
    %1807 = vmatprep.subr.mxu0 0.0
    %1808 = vmatpush2.msra.mxu0 0.0
    %1809 = vmatprep.subr.mxu0 0.0
    %1810 = vmatpush2.msra.mxu0 0.0
    %1811 = vmatprep.subr.mxu0 0.0
    %1812 = vmatpush2.msra.mxu0 0.0
    %1813 = vmatprep.subr.mxu0 0.0
    %1814 = vmatpush2.msra.mxu0 0.0
    %1815 = vmatprep.subr.mxu0 0.0
    %1816 = vmatpush2.msra.mxu0 0.0
    %1817 = vmatprep.subr.mxu0 0.0
    %1818 = vmatpush2.msra.mxu0 0.0
    %1819 = vmatprep.subr.mxu0 0.0
    %1820 = vmatpush2.msra.mxu0 0.0
    %1821 = vmatprep.mubr.f32.mxu0 0.0
    %1822 = vmatmul.mubr.f32.gmra.mxu0 %v1755
    %v1823 = vpop.f32.mrf.mxu0
    %v1824 = vadd.f32 0.0, %v1823
    %v1825 = vpop.f32.mrf.mxu0
    %1826 = vdwg.mxu0
    %v1827 = vadd.f32 %v1676, %v1824
    %s1828 = scalar_lea.vmem %s2, 56
    %v1829 = vld [vmem:[%s1828] sm:$0xff]
    %v1831 = vsel %vm601, %v1829, 0
    %1833 = vmatprep.subr.mxu0 0.0
    %1834 = vmatpush1.msra.mxu0 0.0
    %1835 = vmatprep.subr.mxu0 0.0
    %1836 = vmatpush1.msra.mxu0 0.0
    %1837 = vmatprep.subr.mxu0 0.0
    %1838 = vmatpush1.msra.mxu0 0.0
    %1839 = vmatprep.subr.mxu0 0.0
    %1840 = vmatpush1.msra.mxu0 0.0
    %1841 = vmatprep.subr.mxu0 0.0
    %1842 = vmatpush1.msra.mxu0 0.0
    %1843 = vmatprep.subr.mxu0 0.0
    %1844 = vmatpush1.msra.mxu0 0.0
    %1845 = vmatprep.subr.mxu0 0.0
    %1846 = vmatpush1.msra.mxu0 0.0
    %1847 = vmatprep.subr.mxu0 0.0
    %1848 = vmatpush1.msra.mxu0 0.0
    %1849 = vmatprep.subr.mxu0 0.0
    %1850 = vmatpush1.msra.mxu0 %v772
    %1851 = vmatprep.subr.mxu0 0.0
    %1852 = vmatpush1.msra.mxu0 %v769
    %1853 = vmatprep.subr.mxu0 0.0
    %1854 = vmatpush1.msra.mxu0 %v764
    %1855 = vmatprep.subr.mxu0 0.0
    %1856 = vmatpush1.msra.mxu0 %v761
    %1857 = vmatprep.subr.mxu0 0.0
    %1858 = vmatpush1.msra.mxu0 %v756
    %1859 = vmatprep.subr.mxu0 0.0
    %1860 = vmatpush1.msra.mxu0 %v753
    %1861 = vmatprep.subr.mxu0 0.0
    %1862 = vmatpush1.msra.mxu0 %v748
    %1863 = vmatprep.subr.mxu0 0.0
    %1864 = vmatpush1.msra.mxu0 %v745
    %1865 = vmatprep.subr.mxu0 0.0
    %1866 = vmatpush2.msra.mxu0 0.0
    %1867 = vmatprep.subr.mxu0 0.0
    %1868 = vmatpush2.msra.mxu0 0.0
    %1869 = vmatprep.subr.mxu0 0.0
    %1870 = vmatpush2.msra.mxu0 0.0
    %1871 = vmatprep.subr.mxu0 0.0
    %1872 = vmatpush2.msra.mxu0 0.0
    %1873 = vmatprep.subr.mxu0 0.0
    %1874 = vmatpush2.msra.mxu0 0.0
    %1875 = vmatprep.subr.mxu0 0.0
    %1876 = vmatpush2.msra.mxu0 0.0
    %1877 = vmatprep.subr.mxu0 0.0
    %1878 = vmatpush2.msra.mxu0 0.0
    %1879 = vmatprep.subr.mxu0 0.0
    %1880 = vmatpush2.msra.mxu0 0.0
    %1881 = vmatprep.subr.mxu0 0.0
    %1882 = vmatpush2.msra.mxu0 0.0
    %1883 = vmatprep.subr.mxu0 0.0
    %1884 = vmatpush2.msra.mxu0 0.0
    %1885 = vmatprep.subr.mxu0 0.0
    %1886 = vmatpush2.msra.mxu0 0.0
    %1887 = vmatprep.subr.mxu0 0.0
    %1888 = vmatpush2.msra.mxu0 0.0
    %1889 = vmatprep.subr.mxu0 0.0
    %1890 = vmatpush2.msra.mxu0 0.0
    %1891 = vmatprep.subr.mxu0 0.0
    %1892 = vmatpush2.msra.mxu0 0.0
    %1893 = vmatprep.subr.mxu0 0.0
    %1894 = vmatpush2.msra.mxu0 0.0
    %1895 = vmatprep.subr.mxu0 0.0
    %1896 = vmatpush2.msra.mxu0 0.0
    %1897 = vmatprep.mubr.f32.mxu0 0.0
    %1898 = vmatmul.mubr.f32.gmra.mxu0 %v1831
    %v1899 = vpop.f32.mrf.mxu0
    %v1900 = vadd.f32 0.0, %v1899
    %v1901 = vpop.f32.mrf.mxu0
    %1902 = vdwg.mxu0
    %s1903 = scalar_lea.vmem %s3, 56
    %v1904 = vld [vmem:[%s1903] sm:$0xff]
    %v1906 = vsel %vm376, %v1900, 0
    %1908 = vmatprep.subr.mxu0 0.0
    %1909 = vmatpush1.msra.mxu0 0.0
    %1910 = vmatprep.subr.mxu0 0.0
    %1911 = vmatpush1.msra.mxu0 0.0
    %1912 = vmatprep.subr.mxu0 0.0
    %1913 = vmatpush1.msra.mxu0 0.0
    %1914 = vmatprep.subr.mxu0 0.0
    %1915 = vmatpush1.msra.mxu0 0.0
    %1916 = vmatprep.subr.mxu0 0.0
    %1917 = vmatpush1.msra.mxu0 0.0
    %1918 = vmatprep.subr.mxu0 0.0
    %1919 = vmatpush1.msra.mxu0 0.0
    %1920 = vmatprep.subr.mxu0 0.0
    %1921 = vmatpush1.msra.mxu0 0.0
    %1922 = vmatprep.subr.mxu0 0.0
    %1923 = vmatpush1.msra.mxu0 0.0
    %1924 = vmatprep.subr.mxu0 0.0
    %1925 = vmatpush1.msra.mxu0 0.0
    %1926 = vmatprep.subr.mxu0 0.0
    %1927 = vmatpush1.msra.mxu0 0.0
    %1928 = vmatprep.subr.mxu0 0.0
    %1929 = vmatpush1.msra.mxu0 0.0
    %1930 = vmatprep.subr.mxu0 0.0
    %1931 = vmatpush1.msra.mxu0 0.0
    %1932 = vmatprep.subr.mxu0 0.0
    %1933 = vmatpush1.msra.mxu0 0.0
    %1934 = vmatprep.subr.mxu0 0.0
    %1935 = vmatpush1.msra.mxu0 0.0
    %1936 = vmatprep.subr.mxu0 0.0
    %1937 = vmatpush1.msra.mxu0 0.0
    %1938 = vmatprep.subr.mxu0 0.0
    %1939 = vmatpush1.msra.mxu0 %v1904
    %1940 = vmatprep.subr.mxu0 0.0
    %1941 = vmatpush2.msra.mxu0 0.0
    %1942 = vmatprep.subr.mxu0 0.0
    %1943 = vmatpush2.msra.mxu0 0.0
    %1944 = vmatprep.subr.mxu0 0.0
    %1945 = vmatpush2.msra.mxu0 0.0
    %1946 = vmatprep.subr.mxu0 0.0
    %1947 = vmatpush2.msra.mxu0 0.0
    %1948 = vmatprep.subr.mxu0 0.0
    %1949 = vmatpush2.msra.mxu0 0.0
    %1950 = vmatprep.subr.mxu0 0.0
    %1951 = vmatpush2.msra.mxu0 0.0
    %1952 = vmatprep.subr.mxu0 0.0
    %1953 = vmatpush2.msra.mxu0 0.0
    %1954 = vmatprep.subr.mxu0 0.0
    %1955 = vmatpush2.msra.mxu0 0.0
    %1956 = vmatprep.subr.mxu0 0.0
    %1957 = vmatpush2.msra.mxu0 0.0
    %1958 = vmatprep.subr.mxu0 0.0
    %1959 = vmatpush2.msra.mxu0 0.0
    %1960 = vmatprep.subr.mxu0 0.0
    %1961 = vmatpush2.msra.mxu0 0.0
    %1962 = vmatprep.subr.mxu0 0.0
    %1963 = vmatpush2.msra.mxu0 0.0
    %1964 = vmatprep.subr.mxu0 0.0
    %1965 = vmatpush2.msra.mxu0 0.0
    %1966 = vmatprep.subr.mxu0 0.0
    %1967 = vmatpush2.msra.mxu0 0.0
    %1968 = vmatprep.subr.mxu0 0.0
    %1969 = vmatpush2.msra.mxu0 0.0
    %1970 = vmatprep.subr.mxu0 0.0
    %1971 = vmatpush2.msra.mxu0 0.0
    %1972 = vmatprep.mubr.f32.mxu0 0.0
    %1973 = vmatmul.mubr.f32.gmra.mxu0 %v1906
    %v1974 = vpop.f32.mrf.mxu0
    %v1975 = vadd.f32 0.0, %v1974
    %v1976 = vpop.f32.mrf.mxu0
    %1977 = vdwg.mxu0
    %v1978 = vadd.f32 %v1827, %v1975
    %v1979 = vld [vmem:[%s4] sm:$0x1]
    %v1981 = vlaneseq
    %v1982 = vshrl.u32 %v1981, 7
    %v1983 = vsub.s32 0, %v1982
    %v1984 = vrot.slane %v1979, %v1983
    %v1986 = vadd.f32 %v1978, %v1984
    %1987 = vst.msk [vmem:[#allocation2] sm:$0xff] %vm601, %v1986
    // Predicated region
    $region22: #{tpu_custom_call.1} parent=1 // pred_check
      _
    $region23: #{tpu_custom_call.1} parent=1 // pred_check_branch
      %1989 = sbr.rel (0) target = $region25
    $region24: #{tpu_custom_call.1} parent=1 // pred_region
      %s1991 = ssub.s32 128, 128
      %1992 = vsyncadd [#allocation3], %s1991
      %s1994 = sshll.u32 [#allocation2], 4
      %s1995 = int_to_ptr.vmem [resolvable:$true] %s1994
      %1997 = dma.vmem_to_hbm [thread:$0]  %s1995, 128, %s5, [#allocation3]
    $region25: #{tpu_custom_call.1} parent=1 // pred_fallthru
      _
    // Predicated region
    $region26: #{tpu_custom_call.1} parent=1 // pred_check
      _
    $region27: #{tpu_custom_call.1} parent=1 // pred_check_branch
      %1999 = sbr.rel (0) target = $region29
    $region28: #{tpu_custom_call.1} parent=1 // pred_region
      %2000 = dma.done [#allocation3], 128
    $region29: #{tpu_custom_call.1} parent=1 // pred_fallthru
      _
    %2001 = vsyncpa [#allocation3], 1

</llo_original>
